<compile_context>
chip_gen: v6e
topology: v6e:2x2x1
jax: 0.10.0
libtpu: 0.0.40
codegen_flags: <defaults>
</compile_context>

<pallas_src>
import functools

import jax
import jax.numpy as jnp
from jax.experimental import pallas as pl
from jax.experimental.pallas import tpu as pltpu

H1, H2, OUT = 64, 32, 2

TK_CAP = 65536          # absolute cap on the K tile (multiple of 128)
_MIB = 1 << 20


# ----------------------------------------------------------------------------
# Hardware / tiling helpers
# ----------------------------------------------------------------------------
def _physical_vmem_bytes():
    """Physical VMEM per TensorCore (best effort; conservative default)."""
    vmem = 64 * _MIB          # v7x; v5e/v6e have 128 MiB
    try:
        info = pltpu.get_tpu_info()
        v = getattr(info, "vmem_capacity_bytes", None)
        if isinstance(v, int) and v > 0:
            vmem = v
    except Exception:
        pass
    return vmem


def _num_tensorcores():
    """TensorCores per chip (dual-TC: v4/v5p megacore, v7x). Safe default 1."""
    try:
        kind = jax.devices()[0].device_kind.lower()
    except Exception:
        return 1
    if "v4" in kind or "v7" in kind:
        return 2
    if "v5" in kind and "lite" not in kind and "v5e" not in kind:
        return 2      # v5p megacore
    return 1


def _padded_bytes(shape2d, dtype):
    """VMEM footprint of a 2-D block after sublane/lane padding."""
    r, c = shape2d
    item = jnp.dtype(dtype).itemsize
    sub = 8 * (4 // item)                 # 8 rows for 32-bit, 16 for 16-bit
    rp = -(-r // sub) * sub
    cp = -(-c // 128) * 128
    return rp * cp * item


def _choose_tk(B, x_dtype, w_dtype, vmem_phys, tk_cap):
    """Largest K tile (multiple of 128) whose double-buffered *padded*
    residency fits a conservative pipeline budget."""
    budget = max(8 * _MIB, min(40 * _MIB, vmem_phys - 24 * _MIB))
    x_item = jnp.dtype(x_dtype).itemsize
    w_item = jnp.dtype(w_dtype).itemsize
    sub_x = 8 * (4 // x_item)
    rows_x = -(-B // sub_x) * sub_x
    # Padded bytes per K element per buffer: x row slab + lane-padded w1 row.
    bytes_per_k = rows_x * x_item + 128 * w_item
    tk = (budget // (2 * bytes_per_k)) // 128 * 128
    cap = max(128, min(tk_cap, TK_CAP)) // 128 * 128
    return int(max(128, min(tk, cap)))


def _vmem_limit_bytes(B, tk, x_dtype, w_dtype, vmem_phys):
    pipeline = 2 * (_padded_bytes((B, tk), x_dtype)
                    + _padded_bytes((tk, H1), w_dtype))
    limit = max(pipeline + 6 * _MIB, 16 * _MIB)   # + resident epilogue + margin
    return int(min(limit, vmem_phys - 8 * _MIB))


# ----------------------------------------------------------------------------
# Kernels
# ----------------------------------------------------------------------------
def _fc1_accumulate(x_ref, w1_ref, acc_ref, g, *, rem, n_k_total, has_oob,
                    compute_dtype):
    """acc += x_tile @ w1_tile for global K-tile index `g` (f32 accumulate)."""
    tk = w1_ref.shape[0]

    def dot_into(x_t, w_t):
        acc_ref[...] += jnp.dot(x_t.astype(compute_dtype),
                                w_t.astype(compute_dtype),
                                preferred_element_type=jnp.float32)

    if rem == tk and not has_oob:
        dot_into(x_ref[...], w1_ref[...])
        return

    if rem != tk:
        # Ragged final tile: only the valid leading slice participates
        # (static sizes) -> no per-call jnp.pad of x or w1, and no dependence
        # on the unspecified out-of-bounds contents of the streamed blocks.
        @pl.when(g == n_k_total - 1)
        def _():
            dot_into(x_ref[:, :rem], w1_ref[:rem, :])

        @pl.when(g < n_k_total - 1)
        def _():
            dot_into(x_ref[...], w1_ref[...])
    else:
        # Exact tiles, but the K-split grid carries trailing no-op steps.
        @pl.when(g < n_k_total)
        def _():
            dot_into(x_ref[...], w1_ref[...])


def _fused_mlp_kernel(x_ref, w1_ref, b1_ref, w2_ref, b2_ref, w3_ref, b3_ref,
                      o_ref, acc_ref, *, rem, n_k_total, compute_dtype):
    """fc1 (tiled K reduction) + fused bias/ReLU/fc2/fc3 finalize."""
    k = pl.program_id(0)

    @pl.when(k == 0)
    def _():
        acc_ref[...] = jnp.zeros_like(acc_ref)

    _fc1_accumulate(x_ref, w1_ref, acc_ref, k, rem=rem, n_k_total=n_k_total,
                    has_oob=False, compute_dtype=compute_dtype)

    @pl.when(k == pl.num_programs(0) - 1)
    def _():
        h1 = jnp.maximum(acc_ref[...] + b1_ref[...], 0.0)
        h2 = jnp.maximum(
            jnp.dot(h1, w2_ref[...], preferred_element_type=jnp.float32)
            + b2_ref[...], 0.0)
        o_ref[...] = (
            jnp.dot(h2, w3_ref[...], preferred_element_type=jnp.float32)
            + b3_ref[...]).astype(o_ref.dtype)


def _fc1_partial_kernel(x_ref, w1_ref, o_ref, acc_ref, *, rem, n_k_total,
                        n_k_per, has_oob, compute_dtype):
    """fc1 partial sum for one K split (leading grid axis is 'parallel')."""
    c = pl.program_id(0)
    k = pl.program_id(1)

    @pl.when(k == 0)
    def _():
        acc_ref[...] = jnp.zeros_like(acc_ref)

    _fc1_accumulate(x_ref, w1_ref, acc_ref, c * n_k_per + k, rem=rem,
                    n_k_total=n_k_total, has_oob=has_oob,
                    compute_dtype=compute_dtype)

    @pl.when(k == pl.num_programs(1) - 1)
    def _():
        o_ref[...] = acc_ref[...][None].astype(o_ref.dtype)


# ----------------------------------------------------------------------------
# Wrapper (call under jax.jit)
# ----------------------------------------------------------------------------
def golf_ball_classifier(x, w1, b1, w2, b2, w3, b3, *,
                         num_k_splits=None, tk_max=None, force_split=False):
    """Forward pass. x: (B, K); w1: (K, 64); w2: (64, 32); w3: (32, 2).

    For best performance convert w1 to bf16 once at weight-load time (the
    kernel streams it as given; a bf16 w1 halves the HBM bytes that dominate
    the runtime). x is streamed in its native dtype and cast in-kernel.
    """
    B, K = x.shape
    assert w1.shape == (K, H1)

    # bf16 compute when the streamed operands are 16-bit (the intended config).
    compute_dtype = (jnp.bfloat16
                     if (w1.dtype == jnp.bfloat16 or x.dtype == jnp.bfloat16)
                     else jnp.float32)

    vmem_phys = _physical_vmem_bytes()
    n_cores = _num_tensorcores()

    # How many TensorCores to split the K reduction over.
    if num_k_splits is None:
        num_k_splits = 2 if (n_cores >= 2 and K >= 2 * TK_CAP) else 1
    if num_k_splits > 1 and n_cores < 2 and not force_split:
        num_k_splits = 1      # 1-TC chip: a 'parallel' axis is just a serial loop
    num_k_splits = int(max(1, min(num_k_splits, 2)))

    tk = _choose_tk(B, x.dtype, w1.dtype, vmem_phys,
                    TK_CAP if tk_max is None else tk_max)

    b1r = b1.reshape(1, H1).astype(jnp.float32)
    b2r = b2.reshape(1, H2).astype(jnp.float32)
    b3r = b3.reshape(1, OUT).astype(jnp.float32)
    w2f = w2.astype(jnp.float32)
    w3f = w3.astype(jnp.float32)

    # --- tiling of the K reduction -------------------------------------------
    if num_k_splits == 1 and K <= tk:
        # Small problem: one fully resident grid step, no K tiling.
        tk_eff, n_k_total, n_k_per = K, 1, 1
    else:
        # Prefer an exact tiling among large tk (no ragged tail); otherwise
        # keep the big tile and handle the ragged final tile in-kernel.
        tk_eff = tk
        lo = max(128, (3 * tk // 4) // 128 * 128)
        for cand in range(tk, lo - 1, -128):
            if K % (cand * num_k_splits) == 0:
                tk_eff = cand
                break
        n_k_total = pl.cdiv(K, tk_eff)
        n_k_per = pl.cdiv(n_k_total, num_k_splits)

    rem = K - (n_k_total - 1) * tk_eff          # valid cols in the final tile
    has_oob = (num_k_splits * n_k_per) != n_k_total
    vmem_limit = _vmem_limit_bytes(B, tk_eff, x.dtype, w1.dtype, vmem_phys)

    if num_k_splits == 1:
        kernel = functools.partial(_fused_mlp_kernel, rem=rem,
                                   n_k_total=n_k_total,
                                   compute_dtype=compute_dtype)
        grid_spec = pltpu.PrefetchScalarGridSpec(
            num_scalar_prefetch=0,
            grid=(n_k_total,),
            in_specs=[
                pl.BlockSpec((B, tk_eff), lambda k: (0, k)),     # x K-tile
                pl.BlockSpec((tk_eff, H1), lambda k: (k, 0)),    # w1 K-tile
                pl.BlockSpec((1, H1), lambda k: (0, 0)),         # b1 (resident)
                pl.BlockSpec((H1, H2), lambda k: (0, 0)),        # w2 (resident)
                pl.BlockSpec((1, H2), lambda k: (0, 0)),         # b2
                pl.BlockSpec((H2, OUT), lambda k: (0, 0)),       # w3
                pl.BlockSpec((1, OUT), lambda k: (0, 0)),        # b3
            ],
            out_specs=pl.BlockSpec((B, OUT), lambda k: (0, 0)),
            scratch_shapes=[pltpu.VMEM((B, H1), jnp.float32)],   # fc1 acc
        )
        return pl.pallas_call(
            kernel,
            out_shape=jax.ShapeDtypeStruct((B, OUT), jnp.float32),
            grid_spec=grid_spec,
            compiler_params=pltpu.CompilerParams(
                dimension_semantics=("arbitrary",),
                vmem_limit_bytes=vmem_limit),
        )(x, w1, b1r, w2f, b2r, w3f, b3r)

    # --- K split across a leading 'parallel' axis (one split per TC) ---------
    nkp, nkt = n_k_per, n_k_total   # captured by the index maps below

    def x_map(c, k):
        return (0, jnp.minimum(c * nkp + k, nkt - 1))

    def w_map(c, k):
        return (jnp.minimum(c * nkp + k, nkt - 1), 0)

    kernel = functools.partial(_fc1_partial_kernel, rem=rem, n_k_total=nkt,
                               n_k_per=nkp, has_oob=has_oob,
                               compute_dtype=compute_dtype)
    partials = pl.pallas_call(
        kernel,
        out_shape=jax.ShapeDtypeStruct((num_k_splits, B, H1), jnp.float32),
        grid_spec=pltpu.PrefetchScalarGridSpec(
            num_scalar_prefetch=0,
            grid=(num_k_splits, n_k_per),
            in_specs=[
                pl.BlockSpec((B, tk_eff), x_map),
                pl.BlockSpec((tk_eff, H1), w_map),
            ],
            out_specs=pl.BlockSpec((1, B, H1), lambda c, k: (c, 0, 0)),
            scratch_shapes=[pltpu.VMEM((B, H1), jnp.float32)],
        ),
        compiler_params=pltpu.CompilerParams(
            dimension_semantics=("parallel", "arbitrary"),
            vmem_limit_bytes=vmem_limit),
    )(x, w1)

    # Tiny (B, 64) epilogue: under jit this is a single small XLA fusion.
    h1 = jnp.maximum(partials.sum(axis=0) + b1r, 0.0)
    h2 = jnp.maximum(h1 @ w2f + b2r, 0.0)
    return h2 @ w3f + b3r


# ----------------------------------------------------------------------------
# Reference + demo
# ----------------------------------------------------------------------------
def _init_linear(key, fan_in, fan_out):
    # PyTorch nn.Linear default init: U(-1/sqrt(fan_in), 1/sqrt(fan_in)).
    kw, kb = jax.random.split(key)
    bound = 1.0 / jnp.sqrt(fan_in)
    w = jax.random.uniform(kw, (fan_in, fan_out), jnp.float32, -bound, bound)
    b = jax.random.uniform(kb, (fan_out,), jnp.float32, -bound, bound)
    return w, b


def _reference(x, w1, b1, w2, b2, w3, b3):
    h1 = jnp.maximum(x @ w1 + b1, 0.0)
    h2 = jnp.maximum(h1 @ w2 + b2, 0.0)
    return h2 @ w3 + b3


if __name__ == "__main__":
    key = jax.random.PRNGKey(0)
    kx, k1, k2, k3, kx2, k4 = jax.random.split(key, 6)

    # Demo shapes: module's 1025 * y_feature inputs with y_feature 4096 -> 4.
    Y_FEATURE = 4
    IN_FEATURES = 1025 * Y_FEATURE  # 4100
    B = 2

    x = jax.random.normal(kx, (B, IN_FEATURES), jnp.float32)
    w1, b1 = _init_linear(k1, IN_FEATURES, H1)
    w2, b2 = _init_linear(k2, H1, H2)
    w3, b3 = _init_linear(k3, H2, OUT)

    # fc1 weight converted to bf16 ONCE at "weight-load time" (not per call).
    w1_bf16 = w1.astype(jnp.bfloat16)

    classifier = jax.jit(golf_ball_classifier,
                         static_argnames=("num_k_splits", "tk_max",
                                          "force_split"))

    ref = _reference(x.astype(jnp.bfloat16).astype(jnp.float32),
                     w1_bf16.astype(jnp.float32), b1, w2, b2, w3, b3)

    # 1) Demo-sized problem: single fully resident grid step, fused kernel.
    out = jax.block_until_ready(classifier(x, w1_bf16, b1, w2, b2, w3, b3))
    assert out.shape == (B, OUT)
    assert jnp.allclose(out, ref, atol=2e-3, rtol=2e-3), (out, ref)

    # 2) Tiled K reduction with an exact tiling (what large K uses on 1-TC chips).
    K_BIG = 128 * 40  # 5120: tiles exactly with tk=640
    xb = jax.random.normal(kx2, (B, K_BIG), jnp.float32)
    w1b, b1b = _init_linear(k4, K_BIG, H1)
    w1b_bf16 = w1b.astype(jnp.bfloat16)
    refb = _reference(xb.astype(jnp.bfloat16).astype(jnp.float32),
                      w1b_bf16.astype(jnp.float32), b1b, w2, b2, w3, b3)
    out_tiled = jax.block_until_ready(
        classifier(xb, w1b_bf16, b1b, w2, b2, w3, b3, tk_max=640))
    assert jnp.allclose(out_tiled, refb, atol=2e-3, rtol=2e-3), (out_tiled, refb)

    # 3) Ragged K (tile does not divide K): in-kernel static-slice tail,
    #    no per-call jnp.pad of x or w1.
    out_ragged = jax.block_until_ready(
        classifier(x, w1_bf16, b1, w2, b2, w3, b3, tk_max=1024))
    assert jnp.allclose(out_ragged, ref, atol=2e-3, rtol=2e-3), (out_ragged, ref)

    # 4) Dual-TensorCore K-split path (auto-selected on v7x/v5p/v4); forced
    #    here so the code path is exercised on any chip.
    out_split = jax.block_until_ready(
        classifier(xb, w1b_bf16, b1b, w2, b2, w3, b3,
                   num_k_splits=2, tk_max=640, force_split=True))
    assert jnp.allclose(out_split, refb, atol=2e-3, rtol=2e-3), (out_split, refb)

    print("KERNEL_OK")
</pallas_src>

<mosaic_0001>
module attributes {stable_mosaic.version = 11 : i64} {
  func.func @_fused_mlp_kernel(%arg0: i32, %arg1: memref<2x4100xf32, #tpu.memory_space<vmem>>, %arg2: memref<4100x64xbf16, #tpu.memory_space<vmem>>, %arg3: memref<1x64xf32, #tpu.memory_space<vmem>>, %arg4: memref<64x32xf32, #tpu.memory_space<vmem>>, %arg5: memref<1x32xf32, #tpu.memory_space<vmem>>, %arg6: memref<32x2xf32, #tpu.memory_space<vmem>>, %arg7: memref<1x2xf32, #tpu.memory_space<vmem>>, %arg8: memref<2x2xf32, #tpu.memory_space<vmem>>, %arg9: memref<2x64xf32, #tpu.memory_space<vmem>>) attributes {dimension_semantics = [#tpu.dimension_semantics<arbitrary>], iteration_bounds = array<i64: 1>, scalar_prefetch = 0 : i64, scratch_operands = 1 : i64, tpu.core_type = #tpu.core_type<tc>, window_params = [{transform_indices = @transform_0, window_bounds = array<i64: 2, 4100>}, {transform_indices = @transform_1, window_bounds = array<i64: 4100, 64>}, {pipeline_mode = #tpu.pipeline_mode<synchronous>, transform_indices = @transform_2, window_bounds = array<i64: 1, 64>}, {pipeline_mode = #tpu.pipeline_mode<synchronous>, transform_indices = @transform_3, window_bounds = array<i64: 64, 32>}, {pipeline_mode = #tpu.pipeline_mode<synchronous>, transform_indices = @transform_4, window_bounds = array<i64: 1, 32>}, {pipeline_mode = #tpu.pipeline_mode<synchronous>, transform_indices = @transform_5, window_bounds = array<i64: 32, 2>}, {pipeline_mode = #tpu.pipeline_mode<synchronous>, transform_indices = @transform_6, window_bounds = array<i64: 1, 2>}, {pipeline_mode = #tpu.pipeline_mode<synchronous>, transform_indices = @transform_7, window_bounds = array<i64: 2, 2>}]} {
    %c0_i32 = arith.constant 0 : i32
    %0 = arith.cmpi eq, %arg0, %c0_i32 : i32
    %1 = arith.extui %0 : i1 to i32
    %c0_i32_0 = arith.constant 0 : i32
    %2 = arith.cmpi ne, %1, %c0_i32_0 : i32
    scf.if %2 {
      %cst_10 = arith.constant 0.000000e+00 : f32
      %13 = vector.broadcast %cst_10 : f32 to vector<2x64xf32>
      %c0_11 = arith.constant 0 : index
      %c0_12 = arith.constant 0 : index
      %14 = vector.load %arg9[%c0_11, %c0_12] : memref<2x64xf32, #tpu.memory_space<vmem>>, vector<2x64xf32>
      tpu.vector_store %arg9[%c0_11, %c0_12], %13 {strides = array<i32>} : memref<2x64xf32, #tpu.memory_space<vmem>>, vector<2x64xf32>,
    } else {
    }
    %c0 = arith.constant 0 : index
    %c0_1 = arith.constant 0 : index
    %3 = vector.load %arg1[%c0, %c0_1] : memref<2x4100xf32, #tpu.memory_space<vmem>>, vector<2x4100xf32>
    %c0_2 = arith.constant 0 : index
    %c0_3 = arith.constant 0 : index
    %4 = vector.load %arg2[%c0_2, %c0_3] : memref<4100x64xbf16, #tpu.memory_space<vmem>>, vector<4100x64xbf16>
    %c0_4 = arith.constant 0 : index
    %c0_5 = arith.constant 0 : index
    %5 = vector.load %arg9[%c0_4, %c0_5] : memref<2x64xf32, #tpu.memory_space<vmem>>, vector<2x64xf32>
    %6 = arith.truncf %3 : vector<2x4100xf32> to vector<2x4100xbf16>
    %cst = arith.constant dense<0.000000e+00> : vector<2x64xf32>
    %7 = tpu.matmul %6, %4, %cst {dimension_numbers = #tpu.dot_dimension_numbers<[1], [0], [0], [1], [0, 0, 1, 1], [], []>} : vector<2x4100xbf16>, vector<4100x64xbf16>, vector<2x64xf32> -> vector<2x64xf32>
    %8 = arith.addf %5, %7 : vector<2x64xf32>
    %c0_6 = arith.constant 0 : index
    %c0_7 = arith.constant 0 : index
    %9 = vector.load %arg9[%c0_6, %c0_7] : memref<2x64xf32, #tpu.memory_space<vmem>>, vector<2x64xf32>
    tpu.vector_store %arg9[%c0_6, %c0_7], %8 {strides = array<i32>} : memref<2x64xf32, #tpu.memory_space<vmem>>, vector<2x64xf32>,
    %c0_i32_8 = arith.constant 0 : i32
    %10 = arith.cmpi eq, %arg0, %c0_i32_8 : i32
    %11 = arith.extui %10 : i1 to i32
    %c0_i32_9 = arith.constant 0 : i32
    %12 = arith.cmpi ne, %11, %c0_i32_9 : i32
    scf.if %12 {
      %c0_10 = arith.constant 0 : index
      %c0_11 = arith.constant 0 : index
      %13 = vector.load %arg9[%c0_10, %c0_11] : memref<2x64xf32, #tpu.memory_space<vmem>>, vector<2x64xf32>
      %c0_12 = arith.constant 0 : index
      %c0_13 = arith.constant 0 : index
      %14 = vector.load %arg3[%c0_12, %c0_13] : memref<1x64xf32, #tpu.memory_space<vmem>>, vector<1x64xf32>
      %15 = vector.broadcast %14 : vector<1x64xf32> to vector<2x64xf32>
      %16 = arith.addf %13, %15 : vector<2x64xf32>
      %cst_14 = arith.constant 0.000000e+00 : f32
      %17 = vector.broadcast %cst_14 : f32 to vector<2x64xf32>
      %18 = arith.maximumf %16, %17 : vector<2x64xf32>
      %c0_15 = arith.constant 0 : index
      %c0_16 = arith.constant 0 : index
      %19 = vector.load %arg4[%c0_15, %c0_16] : memref<64x32xf32, #tpu.memory_space<vmem>>, vector<64x32xf32>
      %cst_17 = arith.constant dense<0.000000e+00> : vector<2x32xf32>
      %20 = tpu.matmul %18, %19, %cst_17 {dimension_numbers = #tpu.dot_dimension_numbers<[1], [0], [0], [1], [0, 0, 1, 1], [], []>} : vector<2x64xf32>, vector<64x32xf32>, vector<2x32xf32> -> vector<2x32xf32>
      %c0_18 = arith.constant 0 : index
      %c0_19 = arith.constant 0 : index
      %21 = vector.load %arg5[%c0_18, %c0_19] : memref<1x32xf32, #tpu.memory_space<vmem>>, vector<1x32xf32>
      %22 = vector.broadcast %21 : vector<1x32xf32> to vector<2x32xf32>
      %23 = arith.addf %20, %22 : vector<2x32xf32>
      %cst_20 = arith.constant 0.000000e+00 : f32
      %24 = vector.broadcast %cst_20 : f32 to vector<2x32xf32>
      %25 = arith.maximumf %23, %24 : vector<2x32xf32>
      %c0_21 = arith.constant 0 : index
      %c0_22 = arith.constant 0 : index
      %26 = vector.load %arg6[%c0_21, %c0_22] : memref<32x2xf32, #tpu.memory_space<vmem>>, vector<32x2xf32>
      %cst_23 = arith.constant dense<0.000000e+00> : vector<2x2xf32>
      %27 = tpu.matmul %25, %26, %cst_23 {dimension_numbers = #tpu.dot_dimension_numbers<[1], [0], [0], [1], [0, 0, 1, 1], [], []>} : vector<2x32xf32>, vector<32x2xf32>, vector<2x2xf32> -> vector<2x2xf32>
      %c0_24 = arith.constant 0 : index
      %c0_25 = arith.constant 0 : index
      %28 = vector.load %arg7[%c0_24, %c0_25] : memref<1x2xf32, #tpu.memory_space<vmem>>, vector<1x2xf32>
      %29 = vector.broadcast %28 : vector<1x2xf32> to vector<2x2xf32>
      %30 = arith.addf %27, %29 : vector<2x2xf32>
      %c0_26 = arith.constant 0 : index
      %c0_27 = arith.constant 0 : index
      %31 = vector.load %arg8[%c0_26, %c0_27] : memref<2x2xf32, #tpu.memory_space<vmem>>, vector<2x2xf32>
      tpu.vector_store %arg8[%c0_26, %c0_27], %30 {strides = array<i32>} : memref<2x2xf32, #tpu.memory_space<vmem>>, vector<2x2xf32>,
    } else {
    }
    return
  }
  func.func @transform_0(%arg0: i32) -> (i32, i32) {
    %c0_i32 = arith.constant 0 : i32
    %c0_i32_0 = arith.constant 0 : i32
    return %c0_i32, %arg0 : i32, i32
  }
  func.func @transform_1(%arg0: i32) -> (i32, i32) {
    %c0_i32 = arith.constant 0 : i32
    %c0_i32_0 = arith.constant 0 : i32
    return %arg0, %c0_i32 : i32, i32
  }
  func.func @transform_2(%arg0: i32) -> (i32, i32) {
    %c0_i32 = arith.constant 0 : i32
    %c0_i32_0 = arith.constant 0 : i32
    %c0_i32_1 = arith.constant 0 : i32
    return %c0_i32, %c0_i32_0 : i32, i32
  }
  func.func @transform_3(%arg0: i32) -> (i32, i32) {
    %c0_i32 = arith.constant 0 : i32
    %c0_i32_0 = arith.constant 0 : i32
    %c0_i32_1 = arith.constant 0 : i32
    return %c0_i32, %c0_i32_0 : i32, i32
  }
  func.func @transform_4(%arg0: i32) -> (i32, i32) {
    %c0_i32 = arith.constant 0 : i32
    %c0_i32_0 = arith.constant 0 : i32
    %c0_i32_1 = arith.constant 0 : i32
    return %c0_i32, %c0_i32_0 : i32, i32
  }
  func.func @transform_5(%arg0: i32) -> (i32, i32) {
    %c0_i32 = arith.constant 0 : i32
    %c0_i32_0 = arith.constant 0 : i32
    %c0_i32_1 = arith.constant 0 : i32
    return %c0_i32, %c0_i32_0 : i32, i32
  }
  func.func @transform_6(%arg0: i32) -> (i32, i32) {
    %c0_i32 = arith.constant 0 : i32
    %c0_i32_0 = arith.constant 0 : i32
    %c0_i32_1 = arith.constant 0 : i32
    return %c0_i32, %c0_i32_0 : i32, i32
  }
  func.func @transform_7(%arg0: i32) -> (i32, i32) {
    %c0_i32 = arith.constant 0 : i32
    %c0_i32_0 = arith.constant 0 : i32
    %c0_i32_1 = arith.constant 0 : i32
    return %c0_i32, %c0_i32_0 : i32, i32
  }
}

</mosaic_0001>

<llo_original>
// kernel: golf_ball_classifier.1
$region0: #{golf_ball_classifier.1}
  #allocation0 [shape = 'u32[]', space=smem, size = 0x4, offset = 0x4, fixed_abs, tag = 'smem constant byte address 0x4 - core index']
  #allocation1 [shape = 'u32[144,128]{1,0:T(1,128)}', space=vmem, size = 0x12000, scoped, tag = 'internal scratch']
  #allocation2 [shape = 'f32[2,64]{1,0:T(2,128)}', space=vmem, size = 0x400, scoped, tag = 'scratch operand']
  %s0 = inlined_call_operand.vmem [shape: f32[2,4100], index: 0, kind: input, shape index: {}]
  %s1 = inlined_call_operand.vmem [shape: bf16[4100,64], index: 1, kind: input, shape index: {}]
  %s2 = inlined_call_operand.vmem [shape: f32[1,64], index: 2, kind: input, shape index: {}]
  %s3 = inlined_call_operand.vmem [shape: f32[64,32], index: 3, kind: input, shape index: {}]
  %s4 = inlined_call_operand.vmem [shape: f32[1,32], index: 4, kind: input, shape index: {}]
  %s5 = inlined_call_operand.vmem [shape: f32[32,2], index: 5, kind: input, shape index: {}]
  %s6 = inlined_call_operand.vmem [shape: f32[1,2], index: 6, kind: input, shape index: {}]
  %s7 = inlined_call_operand.hbm [shape: f32[2,2], index: 7, kind: output, shape index: {}]
  %s8 = sld [smem:[#allocation0]]
  $region46: #{golf_ball_classifier.1} parent=0
    _
  %s10 = ssub.s32 1, %s8
  %s11 = scalar_select 0, %s10, %s8
  $region1: #{golf_ball_classifier.1} parent=0
    #allocation3 [shape = 'u8[1024]{0}', space=vmem, size = 0x400, scoped, tag = 'output window, operand 0, single buffered']
    #allocation4 [shape = 's32[1]{0}', space=sflag, size = 0x4, scoped, tag = 'scoped memory for golf_ball_classifier.1']
    %12 = vsyncpa [#allocation4], 0
    // Predicated region
    $region2: #{golf_ball_classifier.1} parent=1 // pred_check
      _
    $region3: #{golf_ball_classifier.1} parent=1 // pred_check_branch
      %14 = sbr.rel (0) target = $region5
    $region4: #{golf_ball_classifier.1} parent=1 // pred_region
      _
    $region5: #{golf_ball_classifier.1} parent=1 // pred_fallthru
      _
    // Predicated region
    $region6: #{golf_ball_classifier.1} parent=1 // pred_check
      _
    $region7: #{golf_ball_classifier.1} parent=1 // pred_check_branch
      %16 = sbr.rel (0) target = $region9
    $region8: #{golf_ball_classifier.1} parent=1 // pred_region
      _
    $region9: #{golf_ball_classifier.1} parent=1 // pred_fallthru
      _
    // Predicated region
    $region10: #{golf_ball_classifier.1} parent=1 // pred_check
      _
    $region11: #{golf_ball_classifier.1} parent=1 // pred_check_branch
      %18 = sbr.rel (0) target = $region13
    $region12: #{golf_ball_classifier.1} parent=1 // pred_region
      _
    $region13: #{golf_ball_classifier.1} parent=1 // pred_fallthru
      _
    // Predicated region
    $region14: #{golf_ball_classifier.1} parent=1 // pred_check
      _
    $region15: #{golf_ball_classifier.1} parent=1 // pred_check_branch
      %20 = sbr.rel (0) target = $region17
    $region16: #{golf_ball_classifier.1} parent=1 // pred_region
      _
    $region17: #{golf_ball_classifier.1} parent=1 // pred_fallthru
      _
    // Predicated region
    $region18: #{golf_ball_classifier.1} parent=1 // pred_check
      _
    $region19: #{golf_ball_classifier.1} parent=1 // pred_check_branch
      %22 = sbr.rel (0) target = $region21
    $region20: #{golf_ball_classifier.1} parent=1 // pred_region
      _
    $region21: #{golf_ball_classifier.1} parent=1 // pred_fallthru
      _
    // Predicated region
    $region22: #{golf_ball_classifier.1} parent=1 // pred_check
      _
    $region23: #{golf_ball_classifier.1} parent=1 // pred_check_branch
      %24 = sbr.rel (0) target = $region25
    $region24: #{golf_ball_classifier.1} parent=1 // pred_region
      _
    $region25: #{golf_ball_classifier.1} parent=1 // pred_fallthru
      _
    // Predicated region
    $region26: #{golf_ball_classifier.1} parent=1 // pred_check
      _
    $region27: #{golf_ball_classifier.1} parent=1 // pred_check_branch
      %26 = sbr.rel (0) target = $region29
    $region28: #{golf_ball_classifier.1} parent=1 // pred_region
      _
    $region29: #{golf_ball_classifier.1} parent=1 // pred_fallthru
      _
    %p28 = scmp.eq.s32.totalorder 0, 0
    // Predicated region
    $region30: #{golf_ball_classifier.1} parent=1 // pred_check
      %p29 = pneg %p28
    $region31: #{golf_ball_classifier.1} parent=1 // pred_check_branch
      %31 = sbr.rel (%p29) target = $region33
    $region32: #{golf_ball_classifier.1} parent=1 // pred_region
      %vm32 = vcmask 517120
      %33 = vst.msk [vmem:[#allocation2] sm:$0x3] %vm32, 0.0
    $region33: #{golf_ball_classifier.1} parent=1 // pred_fallthru
      _
    %v34 = vld [vmem:[%s0] sm:$0xff]
    %v35 = vld [vmem:[%s0 + $0x8] sm:$0xff]
    %v36 = vld [vmem:[%s0 + $0x10] sm:$0xff]
    %v37 = vld [vmem:[%s0 + $0x18] sm:$0xff]
    %v38 = vld [vmem:[%s0 + $0x20] sm:$0xff]
    %v39 = vld [vmem:[%s0 + $0x28] sm:$0xff]
    %v40 = vld [vmem:[%s0 + $0x30] sm:$0xff]
    %v41 = vld [vmem:[%s0 + $0x38] sm:$0xff]
    %v42 = vld [vmem:[%s0 + $0x40] sm:$0x3]
    %v43 = vld [vmem:[%s1] sm:$0xf]
    %v44 = vld [vmem:[%s1 + $0x4] sm:$0xf]
    %v45 = vld [vmem:[%s1 + $0x8] sm:$0xf]
    %v46 = vld [vmem:[%s1 + $0xc] sm:$0xf]
    %v47 = vld [vmem:[%s1 + $0x10] sm:$0xf]
    %v48 = vld [vmem:[%s1 + $0x14] sm:$0xf]
    %v49 = vld [vmem:[%s1 + $0x18] sm:$0xf]
    %v50 = vld [vmem:[%s1 + $0x1c] sm:$0xf]
    %v51 = vld [vmem:[%s1 + $0x20] sm:$0xf]
    %v52 = vld [vmem:[%s1 + $0x24] sm:$0xf]
    %v53 = vld [vmem:[%s1 + $0x28] sm:$0xf]
    %v54 = vld [vmem:[%s1 + $0x2c] sm:$0xf]
    %v55 = vld [vmem:[%s1 + $0x30] sm:$0xf]
    %v56 = vld [vmem:[%s1 + $0x34] sm:$0xf]
    %v57 = vld [vmem:[%s1 + $0x38] sm:$0xf]
    %v58 = vld [vmem:[%s1 + $0x3c] sm:$0xf]
    %v59 = vld [vmem:[%s1 + $0x40] sm:$0xf]
    %v60 = vld [vmem:[%s1 + $0x44] sm:$0xf]
    %v61 = vld [vmem:[%s1 + $0x48] sm:$0xf]
    %v62 = vld [vmem:[%s1 + $0x4c] sm:$0xf]
    %v63 = vld [vmem:[%s1 + $0x50] sm:$0xf]
    %v64 = vld [vmem:[%s1 + $0x54] sm:$0xf]
    %v65 = vld [vmem:[%s1 + $0x58] sm:$0xf]
    %v66 = vld [vmem:[%s1 + $0x5c] sm:$0xf]
    %v67 = vld [vmem:[%s1 + $0x60] sm:$0xf]
    %v68 = vld [vmem:[%s1 + $0x64] sm:$0xf]
    %v69 = vld [vmem:[%s1 + $0x68] sm:$0xf]
    %v70 = vld [vmem:[%s1 + $0x6c] sm:$0xf]
    %v71 = vld [vmem:[%s1 + $0x70] sm:$0xf]
    %v72 = vld [vmem:[%s1 + $0x74] sm:$0xf]
    %v73 = vld [vmem:[%s1 + $0x78] sm:$0xf]
    %v74 = vld [vmem:[%s1 + $0x7c] sm:$0xf]
    %v75 = vld [vmem:[%s1 + $0x80] sm:$0xf]
    %v76 = vld [vmem:[%s1 + $0x84] sm:$0xf]
    %v77 = vld [vmem:[%s1 + $0x88] sm:$0xf]
    %v78 = vld [vmem:[%s1 + $0x8c] sm:$0xf]
    %v79 = vld [vmem:[%s1 + $0x90] sm:$0xf]
    %v80 = vld [vmem:[%s1 + $0x94] sm:$0xf]
    %v81 = vld [vmem:[%s1 + $0x98] sm:$0xf]
    %v82 = vld [vmem:[%s1 + $0x9c] sm:$0xf]
    %v83 = vld [vmem:[%s1 + $0xa0] sm:$0xf]
    %v84 = vld [vmem:[%s1 + $0xa4] sm:$0xf]
    %v85 = vld [vmem:[%s1 + $0xa8] sm:$0xf]
    %v86 = vld [vmem:[%s1 + $0xac] sm:$0xf]
    %v87 = vld [vmem:[%s1 + $0xb0] sm:$0xf]
    %v88 = vld [vmem:[%s1 + $0xb4] sm:$0xf]
    %v89 = vld [vmem:[%s1 + $0xb8] sm:$0xf]
    %v90 = vld [vmem:[%s1 + $0xbc] sm:$0xf]
    %v91 = vld [vmem:[%s1 + $0xc0] sm:$0xf]
    %v92 = vld [vmem:[%s1 + $0xc4] sm:$0xf]
    %v93 = vld [vmem:[%s1 + $0xc8] sm:$0xf]
    %v94 = vld [vmem:[%s1 + $0xcc] sm:$0xf]
    %v95 = vld [vmem:[%s1 + $0xd0] sm:$0xf]
    %v96 = vld [vmem:[%s1 + $0xd4] sm:$0xf]
    %v97 = vld [vmem:[%s1 + $0xd8] sm:$0xf]
    %v98 = vld [vmem:[%s1 + $0xdc] sm:$0xf]
    %v99 = vld [vmem:[%s1 + $0xe0] sm:$0xf]
    %v100 = vld [vmem:[%s1 + $0xe4] sm:$0xf]
    %v101 = vld [vmem:[%s1 + $0xe8] sm:$0xf]
    %v102 = vld [vmem:[%s1 + $0xec] sm:$0xf]
    %v103 = vld [vmem:[%s1 + $0xf0] sm:$0xf]
    %v104 = vld [vmem:[%s1 + $0xf4] sm:$0xf]
    %v105 = vld [vmem:[%s1 + $0xf8] sm:$0xf]
    %v106 = vld [vmem:[%s1 + $0xfc] sm:$0xf]
    %v107 = vld [vmem:[%s1 + $0x100] sm:$0xf]
    %v108 = vld [vmem:[%s1 + $0x104] sm:$0xf]
    %v109 = vld [vmem:[%s1 + $0x108] sm:$0xf]
    %v110 = vld [vmem:[%s1 + $0x10c] sm:$0xf]
    %v111 = vld [vmem:[%s1 + $0x110] sm:$0xf]
    %v112 = vld [vmem:[%s1 + $0x114] sm:$0xf]
    %v113 = vld [vmem:[%s1 + $0x118] sm:$0xf]
    %v114 = vld [vmem:[%s1 + $0x11c] sm:$0xf]
    %v115 = vld [vmem:[%s1 + $0x120] sm:$0xf]
    %v116 = vld [vmem:[%s1 + $0x124] sm:$0xf]
    %v117 = vld [vmem:[%s1 + $0x128] sm:$0xf]
    %v118 = vld [vmem:[%s1 + $0x12c] sm:$0xf]
    %v119 = vld [vmem:[%s1 + $0x130] sm:$0xf]
    %v120 = vld [vmem:[%s1 + $0x134] sm:$0xf]
    %v121 = vld [vmem:[%s1 + $0x138] sm:$0xf]
    %v122 = vld [vmem:[%s1 + $0x13c] sm:$0xf]
    %v123 = vld [vmem:[%s1 + $0x140] sm:$0xf]
    %v124 = vld [vmem:[%s1 + $0x144] sm:$0xf]
    %v125 = vld [vmem:[%s1 + $0x148] sm:$0xf]
    %v126 = vld [vmem:[%s1 + $0x14c] sm:$0xf]
    %v127 = vld [vmem:[%s1 + $0x150] sm:$0xf]
    %v128 = vld [vmem:[%s1 + $0x154] sm:$0xf]
    %v129 = vld [vmem:[%s1 + $0x158] sm:$0xf]
    %v130 = vld [vmem:[%s1 + $0x15c] sm:$0xf]
    %v131 = vld [vmem:[%s1 + $0x160] sm:$0xf]
    %v132 = vld [vmem:[%s1 + $0x164] sm:$0xf]
    %v133 = vld [vmem:[%s1 + $0x168] sm:$0xf]
    %v134 = vld [vmem:[%s1 + $0x16c] sm:$0xf]
    %v135 = vld [vmem:[%s1 + $0x170] sm:$0xf]
    %v136 = vld [vmem:[%s1 + $0x174] sm:$0xf]
    %v137 = vld [vmem:[%s1 + $0x178] sm:$0xf]
    %v138 = vld [vmem:[%s1 + $0x17c] sm:$0xf]
    %v139 = vld [vmem:[%s1 + $0x180] sm:$0xf]
    %v140 = vld [vmem:[%s1 + $0x184] sm:$0xf]
    %v141 = vld [vmem:[%s1 + $0x188] sm:$0xf]
    %v142 = vld [vmem:[%s1 + $0x18c] sm:$0xf]
    %v143 = vld [vmem:[%s1 + $0x190] sm:$0xf]
    %v144 = vld [vmem:[%s1 + $0x194] sm:$0xf]
    %v145 = vld [vmem:[%s1 + $0x198] sm:$0xf]
    %v146 = vld [vmem:[%s1 + $0x19c] sm:$0xf]
    %v147 = vld [vmem:[%s1 + $0x1a0] sm:$0xf]
    %v148 = vld [vmem:[%s1 + $0x1a4] sm:$0xf]
    %v149 = vld [vmem:[%s1 + $0x1a8] sm:$0xf]
    %v150 = vld [vmem:[%s1 + $0x1ac] sm:$0xf]
    %v151 = vld [vmem:[%s1 + $0x1b0] sm:$0xf]
    %v152 = vld [vmem:[%s1 + $0x1b4] sm:$0xf]
    %v153 = vld [vmem:[%s1 + $0x1b8] sm:$0xf]
    %v154 = vld [vmem:[%s1 + $0x1bc] sm:$0xf]
    %v155 = vld [vmem:[%s1 + $0x1c0] sm:$0xf]
    %v156 = vld [vmem:[%s1 + $0x1c4] sm:$0xf]
    %v157 = vld [vmem:[%s1 + $0x1c8] sm:$0xf]
    %v158 = vld [vmem:[%s1 + $0x1cc] sm:$0xf]
    %v159 = vld [vmem:[%s1 + $0x1d0] sm:$0xf]
    %v160 = vld [vmem:[%s1 + $0x1d4] sm:$0xf]
    %v161 = vld [vmem:[%s1 + $0x1d8] sm:$0xf]
    %v162 = vld [vmem:[%s1 + $0x1dc] sm:$0xf]
    %v163 = vld [vmem:[%s1 + $0x1e0] sm:$0xf]
    %v164 = vld [vmem:[%s1 + $0x1e4] sm:$0xf]
    %v165 = vld [vmem:[%s1 + $0x1e8] sm:$0xf]
    %v166 = vld [vmem:[%s1 + $0x1ec] sm:$0xf]
    %v167 = vld [vmem:[%s1 + $0x1f0] sm:$0xf]
    %v168 = vld [vmem:[%s1 + $0x1f4] sm:$0xf]
    %v169 = vld [vmem:[%s1 + $0x1f8] sm:$0xf]
    %v170 = vld [vmem:[%s1 + $0x1fc] sm:$0xf]
    %v171 = vld [vmem:[%s1 + $0x200] sm:$0xf]
    %v172 = vld [vmem:[%s1 + $0x204] sm:$0xf]
    %v173 = vld [vmem:[%s1 + $0x208] sm:$0xf]
    %v174 = vld [vmem:[%s1 + $0x20c] sm:$0xf]
    %v175 = vld [vmem:[%s1 + $0x210] sm:$0xf]
    %v176 = vld [vmem:[%s1 + $0x214] sm:$0xf]
    %v177 = vld [vmem:[%s1 + $0x218] sm:$0xf]
    %v178 = vld [vmem:[%s1 + $0x21c] sm:$0xf]
    %v179 = vld [vmem:[%s1 + $0x220] sm:$0xf]
    %v180 = vld [vmem:[%s1 + $0x224] sm:$0xf]
    %v181 = vld [vmem:[%s1 + $0x228] sm:$0xf]
    %v182 = vld [vmem:[%s1 + $0x22c] sm:$0xf]
    %v183 = vld [vmem:[%s1 + $0x230] sm:$0xf]
    %v184 = vld [vmem:[%s1 + $0x234] sm:$0xf]
    %v185 = vld [vmem:[%s1 + $0x238] sm:$0xf]
    %v186 = vld [vmem:[%s1 + $0x23c] sm:$0xf]
    %v187 = vld [vmem:[%s1 + $0x240] sm:$0xf]
    %v188 = vld [vmem:[%s1 + $0x244] sm:$0xf]
    %v189 = vld [vmem:[%s1 + $0x248] sm:$0xf]
    %v190 = vld [vmem:[%s1 + $0x24c] sm:$0xf]
    %v191 = vld [vmem:[%s1 + $0x250] sm:$0xf]
    %v192 = vld [vmem:[%s1 + $0x254] sm:$0xf]
    %v193 = vld [vmem:[%s1 + $0x258] sm:$0xf]
    %v194 = vld [vmem:[%s1 + $0x25c] sm:$0xf]
    %v195 = vld [vmem:[%s1 + $0x260] sm:$0xf]
    %v196 = vld [vmem:[%s1 + $0x264] sm:$0xf]
    %v197 = vld [vmem:[%s1 + $0x268] sm:$0xf]
    %v198 = vld [vmem:[%s1 + $0x26c] sm:$0xf]
    %v199 = vld [vmem:[%s1 + $0x270] sm:$0xf]
    %v200 = vld [vmem:[%s1 + $0x274] sm:$0xf]
    %v201 = vld [vmem:[%s1 + $0x278] sm:$0xf]
    %v202 = vld [vmem:[%s1 + $0x27c] sm:$0xf]
    %v203 = vld [vmem:[%s1 + $0x280] sm:$0xf]
    %v204 = vld [vmem:[%s1 + $0x284] sm:$0xf]
    %v205 = vld [vmem:[%s1 + $0x288] sm:$0xf]
    %v206 = vld [vmem:[%s1 + $0x28c] sm:$0xf]
    %v207 = vld [vmem:[%s1 + $0x290] sm:$0xf]
    %v208 = vld [vmem:[%s1 + $0x294] sm:$0xf]
    %v209 = vld [vmem:[%s1 + $0x298] sm:$0xf]
    %v210 = vld [vmem:[%s1 + $0x29c] sm:$0xf]
    %v211 = vld [vmem:[%s1 + $0x2a0] sm:$0xf]
    %v212 = vld [vmem:[%s1 + $0x2a4] sm:$0xf]
    %v213 = vld [vmem:[%s1 + $0x2a8] sm:$0xf]
    %v214 = vld [vmem:[%s1 + $0x2ac] sm:$0xf]
    %v215 = vld [vmem:[%s1 + $0x2b0] sm:$0xf]
    %v216 = vld [vmem:[%s1 + $0x2b4] sm:$0xf]
    %v217 = vld [vmem:[%s1 + $0x2b8] sm:$0xf]
    %v218 = vld [vmem:[%s1 + $0x2bc] sm:$0xf]
    %v219 = vld [vmem:[%s1 + $0x2c0] sm:$0xf]
    %v220 = vld [vmem:[%s1 + $0x2c4] sm:$0xf]
    %v221 = vld [vmem:[%s1 + $0x2c8] sm:$0xf]
    %v222 = vld [vmem:[%s1 + $0x2cc] sm:$0xf]
    %v223 = vld [vmem:[%s1 + $0x2d0] sm:$0xf]
    %v224 = vld [vmem:[%s1 + $0x2d4] sm:$0xf]
    %v225 = vld [vmem:[%s1 + $0x2d8] sm:$0xf]
    %v226 = vld [vmem:[%s1 + $0x2dc] sm:$0xf]
    %v227 = vld [vmem:[%s1 + $0x2e0] sm:$0xf]
    %v228 = vld [vmem:[%s1 + $0x2e4] sm:$0xf]
    %v229 = vld [vmem:[%s1 + $0x2e8] sm:$0xf]
    %v230 = vld [vmem:[%s1 + $0x2ec] sm:$0xf]
    %v231 = vld [vmem:[%s1 + $0x2f0] sm:$0xf]
    %v232 = vld [vmem:[%s1 + $0x2f4] sm:$0xf]
    %v233 = vld [vmem:[%s1 + $0x2f8] sm:$0xf]
    %v234 = vld [vmem:[%s1 + $0x2fc] sm:$0xf]
    %v235 = vld [vmem:[%s1 + $0x300] sm:$0xf]
    %v236 = vld [vmem:[%s1 + $0x304] sm:$0xf]
    %v237 = vld [vmem:[%s1 + $0x308] sm:$0xf]
    %v238 = vld [vmem:[%s1 + $0x30c] sm:$0xf]
    %v239 = vld [vmem:[%s1 + $0x310] sm:$0xf]
    %v240 = vld [vmem:[%s1 + $0x314] sm:$0xf]
    %v241 = vld [vmem:[%s1 + $0x318] sm:$0xf]
    %v242 = vld [vmem:[%s1 + $0x31c] sm:$0xf]
    %v243 = vld [vmem:[%s1 + $0x320] sm:$0xf]
    %v244 = vld [vmem:[%s1 + $0x324] sm:$0xf]
    %v245 = vld [vmem:[%s1 + $0x328] sm:$0xf]
    %v246 = vld [vmem:[%s1 + $0x32c] sm:$0xf]
    %v247 = vld [vmem:[%s1 + $0x330] sm:$0xf]
    %v248 = vld [vmem:[%s1 + $0x334] sm:$0xf]
    %v249 = vld [vmem:[%s1 + $0x338] sm:$0xf]
    %v250 = vld [vmem:[%s1 + $0x33c] sm:$0xf]
    %v251 = vld [vmem:[%s1 + $0x340] sm:$0xf]
    %v252 = vld [vmem:[%s1 + $0x344] sm:$0xf]
    %v253 = vld [vmem:[%s1 + $0x348] sm:$0xf]
    %v254 = vld [vmem:[%s1 + $0x34c] sm:$0xf]
    %v255 = vld [vmem:[%s1 + $0x350] sm:$0xf]
    %v256 = vld [vmem:[%s1 + $0x354] sm:$0xf]
    %v257 = vld [vmem:[%s1 + $0x358] sm:$0xf]
    %v258 = vld [vmem:[%s1 + $0x35c] sm:$0xf]
    %v259 = vld [vmem:[%s1 + $0x360] sm:$0xf]
    %v260 = vld [vmem:[%s1 + $0x364] sm:$0xf]
    %v261 = vld [vmem:[%s1 + $0x368] sm:$0xf]
    %v262 = vld [vmem:[%s1 + $0x36c] sm:$0xf]
    %v263 = vld [vmem:[%s1 + $0x370] sm:$0xf]
    %v264 = vld [vmem:[%s1 + $0x374] sm:$0xf]
    %v265 = vld [vmem:[%s1 + $0x378] sm:$0xf]
    %v266 = vld [vmem:[%s1 + $0x37c] sm:$0xf]
    %v267 = vld [vmem:[%s1 + $0x380] sm:$0xf]
    %v268 = vld [vmem:[%s1 + $0x384] sm:$0xf]
    %v269 = vld [vmem:[%s1 + $0x388] sm:$0xf]
    %v270 = vld [vmem:[%s1 + $0x38c] sm:$0xf]
    %v271 = vld [vmem:[%s1 + $0x390] sm:$0xf]
    %v272 = vld [vmem:[%s1 + $0x394] sm:$0xf]
    %v273 = vld [vmem:[%s1 + $0x398] sm:$0xf]
    %v274 = vld [vmem:[%s1 + $0x39c] sm:$0xf]
    %v275 = vld [vmem:[%s1 + $0x3a0] sm:$0xf]
    %v276 = vld [vmem:[%s1 + $0x3a4] sm:$0xf]
    %v277 = vld [vmem:[%s1 + $0x3a8] sm:$0xf]
    %v278 = vld [vmem:[%s1 + $0x3ac] sm:$0xf]
    %v279 = vld [vmem:[%s1 + $0x3b0] sm:$0xf]
    %v280 = vld [vmem:[%s1 + $0x3b4] sm:$0xf]
    %v281 = vld [vmem:[%s1 + $0x3b8] sm:$0xf]
    %v282 = vld [vmem:[%s1 + $0x3bc] sm:$0xf]
    %v283 = vld [vmem:[%s1 + $0x3c0] sm:$0xf]
    %v284 = vld [vmem:[%s1 + $0x3c4] sm:$0xf]
    %v285 = vld [vmem:[%s1 + $0x3c8] sm:$0xf]
    %v286 = vld [vmem:[%s1 + $0x3cc] sm:$0xf]
    %v287 = vld [vmem:[%s1 + $0x3d0] sm:$0xf]
    %v288 = vld [vmem:[%s1 + $0x3d4] sm:$0xf]
    %v289 = vld [vmem:[%s1 + $0x3d8] sm:$0xf]
    %v290 = vld [vmem:[%s1 + $0x3dc] sm:$0xf]
    %v291 = vld [vmem:[%s1 + $0x3e0] sm:$0xf]
    %v292 = vld [vmem:[%s1 + $0x3e4] sm:$0xf]
    %v293 = vld [vmem:[%s1 + $0x3e8] sm:$0xf]
    %v294 = vld [vmem:[%s1 + $0x3ec] sm:$0xf]
    %v295 = vld [vmem:[%s1 + $0x3f0] sm:$0xf]
    %v296 = vld [vmem:[%s1 + $0x3f4] sm:$0xf]
    %v297 = vld [vmem:[%s1 + $0x3f8] sm:$0xf]
    %v298 = vld [vmem:[%s1 + $0x3fc] sm:$0xf]
    %v299 = vld [vmem:[%s1 + $0x400] sm:$0xf]
    %v300 = vld [vmem:[%s1 + $0x404] sm:$0xf]
    %v301 = vld [vmem:[%s1 + $0x408] sm:$0xf]
    %v302 = vld [vmem:[%s1 + $0x40c] sm:$0xf]
    %v303 = vld [vmem:[%s1 + $0x410] sm:$0xf]
    %v304 = vld [vmem:[%s1 + $0x414] sm:$0xf]
    %v305 = vld [vmem:[%s1 + $0x418] sm:$0xf]
    %v306 = vld [vmem:[%s1 + $0x41c] sm:$0xf]
    %v307 = vld [vmem:[%s1 + $0x420] sm:$0xf]
    %v308 = vld [vmem:[%s1 + $0x424] sm:$0xf]
    %v309 = vld [vmem:[%s1 + $0x428] sm:$0xf]
    %v310 = vld [vmem:[%s1 + $0x42c] sm:$0xf]
    %v311 = vld [vmem:[%s1 + $0x430] sm:$0xf]
    %v312 = vld [vmem:[%s1 + $0x434] sm:$0xf]
    %v313 = vld [vmem:[%s1 + $0x438] sm:$0xf]
    %v314 = vld [vmem:[%s1 + $0x43c] sm:$0xf]
    %v315 = vld [vmem:[%s1 + $0x440] sm:$0xf]
    %v316 = vld [vmem:[%s1 + $0x444] sm:$0xf]
    %v317 = vld [vmem:[%s1 + $0x448] sm:$0xf]
    %v318 = vld [vmem:[%s1 + $0x44c] sm:$0xf]
    %v319 = vld [vmem:[%s1 + $0x450] sm:$0xf]
    %v320 = vld [vmem:[%s1 + $0x454] sm:$0xf]
    %v321 = vld [vmem:[%s1 + $0x458] sm:$0xf]
    %v322 = vld [vmem:[%s1 + $0x45c] sm:$0xf]
    %v323 = vld [vmem:[%s1 + $0x460] sm:$0xf]
    %v324 = vld [vmem:[%s1 + $0x464] sm:$0xf]
    %v325 = vld [vmem:[%s1 + $0x468] sm:$0xf]
    %v326 = vld [vmem:[%s1 + $0x46c] sm:$0xf]
    %v327 = vld [vmem:[%s1 + $0x470] sm:$0xf]
    %v328 = vld [vmem:[%s1 + $0x474] sm:$0xf]
    %v329 = vld [vmem:[%s1 + $0x478] sm:$0xf]
    %v330 = vld [vmem:[%s1 + $0x47c] sm:$0xf]
    %v331 = vld [vmem:[%s1 + $0x480] sm:$0xf]
    %v332 = vld [vmem:[%s1 + $0x484] sm:$0xf]
    %v333 = vld [vmem:[%s1 + $0x488] sm:$0xf]
    %v334 = vld [vmem:[%s1 + $0x48c] sm:$0xf]
    %v335 = vld [vmem:[%s1 + $0x490] sm:$0xf]
    %v336 = vld [vmem:[%s1 + $0x494] sm:$0xf]
    %v337 = vld [vmem:[%s1 + $0x498] sm:$0xf]
    %v338 = vld [vmem:[%s1 + $0x49c] sm:$0xf]
    %v339 = vld [vmem:[%s1 + $0x4a0] sm:$0xf]
    %v340 = vld [vmem:[%s1 + $0x4a4] sm:$0xf]
    %v341 = vld [vmem:[%s1 + $0x4a8] sm:$0xf]
    %v342 = vld [vmem:[%s1 + $0x4ac] sm:$0xf]
    %v343 = vld [vmem:[%s1 + $0x4b0] sm:$0xf]
    %v344 = vld [vmem:[%s1 + $0x4b4] sm:$0xf]
    %v345 = vld [vmem:[%s1 + $0x4b8] sm:$0xf]
    %v346 = vld [vmem:[%s1 + $0x4bc] sm:$0xf]
    %v347 = vld [vmem:[%s1 + $0x4c0] sm:$0xf]
    %v348 = vld [vmem:[%s1 + $0x4c4] sm:$0xf]
    %v349 = vld [vmem:[%s1 + $0x4c8] sm:$0xf]
    %v350 = vld [vmem:[%s1 + $0x4cc] sm:$0xf]
    %v351 = vld [vmem:[%s1 + $0x4d0] sm:$0xf]
    %v352 = vld [vmem:[%s1 + $0x4d4] sm:$0xf]
    %v353 = vld [vmem:[%s1 + $0x4d8] sm:$0xf]
    %v354 = vld [vmem:[%s1 + $0x4dc] sm:$0xf]
    %v355 = vld [vmem:[%s1 + $0x4e0] sm:$0xf]
    %v356 = vld [vmem:[%s1 + $0x4e4] sm:$0xf]
    %v357 = vld [vmem:[%s1 + $0x4e8] sm:$0xf]
    %v358 = vld [vmem:[%s1 + $0x4ec] sm:$0xf]
    %v359 = vld [vmem:[%s1 + $0x4f0] sm:$0xf]
    %v360 = vld [vmem:[%s1 + $0x4f4] sm:$0xf]
    %v361 = vld [vmem:[%s1 + $0x4f8] sm:$0xf]
    %v362 = vld [vmem:[%s1 + $0x4fc] sm:$0xf]
    %v363 = vld [vmem:[%s1 + $0x500] sm:$0xf]
    %v364 = vld [vmem:[%s1 + $0x504] sm:$0xf]
    %v365 = vld [vmem:[%s1 + $0x508] sm:$0xf]
    %v366 = vld [vmem:[%s1 + $0x50c] sm:$0xf]
    %v367 = vld [vmem:[%s1 + $0x510] sm:$0xf]
    %v368 = vld [vmem:[%s1 + $0x514] sm:$0xf]
    %v369 = vld [vmem:[%s1 + $0x518] sm:$0xf]
    %v370 = vld [vmem:[%s1 + $0x51c] sm:$0xf]
    %v371 = vld [vmem:[%s1 + $0x520] sm:$0xf]
    %v372 = vld [vmem:[%s1 + $0x524] sm:$0xf]
    %v373 = vld [vmem:[%s1 + $0x528] sm:$0xf]
    %v374 = vld [vmem:[%s1 + $0x52c] sm:$0xf]
    %v375 = vld [vmem:[%s1 + $0x530] sm:$0xf]
    %v376 = vld [vmem:[%s1 + $0x534] sm:$0xf]
    %v377 = vld [vmem:[%s1 + $0x538] sm:$0xf]
    %v378 = vld [vmem:[%s1 + $0x53c] sm:$0xf]
    %v379 = vld [vmem:[%s1 + $0x540] sm:$0xf]
    %v380 = vld [vmem:[%s1 + $0x544] sm:$0xf]
    %v381 = vld [vmem:[%s1 + $0x548] sm:$0xf]
    %v382 = vld [vmem:[%s1 + $0x54c] sm:$0xf]
    %v383 = vld [vmem:[%s1 + $0x550] sm:$0xf]
    %v384 = vld [vmem:[%s1 + $0x554] sm:$0xf]
    %v385 = vld [vmem:[%s1 + $0x558] sm:$0xf]
    %v386 = vld [vmem:[%s1 + $0x55c] sm:$0xf]
    %v387 = vld [vmem:[%s1 + $0x560] sm:$0xf]
    %v388 = vld [vmem:[%s1 + $0x564] sm:$0xf]
    %v389 = vld [vmem:[%s1 + $0x568] sm:$0xf]
    %v390 = vld [vmem:[%s1 + $0x56c] sm:$0xf]
    %v391 = vld [vmem:[%s1 + $0x570] sm:$0xf]
    %v392 = vld [vmem:[%s1 + $0x574] sm:$0xf]
    %v393 = vld [vmem:[%s1 + $0x578] sm:$0xf]
    %v394 = vld [vmem:[%s1 + $0x57c] sm:$0xf]
    %v395 = vld [vmem:[%s1 + $0x580] sm:$0xf]
    %v396 = vld [vmem:[%s1 + $0x584] sm:$0xf]
    %v397 = vld [vmem:[%s1 + $0x588] sm:$0xf]
    %v398 = vld [vmem:[%s1 + $0x58c] sm:$0xf]
    %v399 = vld [vmem:[%s1 + $0x590] sm:$0xf]
    %v400 = vld [vmem:[%s1 + $0x594] sm:$0xf]
    %v401 = vld [vmem:[%s1 + $0x598] sm:$0xf]
    %v402 = vld [vmem:[%s1 + $0x59c] sm:$0xf]
    %v403 = vld [vmem:[%s1 + $0x5a0] sm:$0xf]
    %v404 = vld [vmem:[%s1 + $0x5a4] sm:$0xf]
    %v405 = vld [vmem:[%s1 + $0x5a8] sm:$0xf]
    %v406 = vld [vmem:[%s1 + $0x5ac] sm:$0xf]
    %v407 = vld [vmem:[%s1 + $0x5b0] sm:$0xf]
    %v408 = vld [vmem:[%s1 + $0x5b4] sm:$0xf]
    %v409 = vld [vmem:[%s1 + $0x5b8] sm:$0xf]
    %v410 = vld [vmem:[%s1 + $0x5bc] sm:$0xf]
    %v411 = vld [vmem:[%s1 + $0x5c0] sm:$0xf]
    %v412 = vld [vmem:[%s1 + $0x5c4] sm:$0xf]
    %v413 = vld [vmem:[%s1 + $0x5c8] sm:$0xf]
    %v414 = vld [vmem:[%s1 + $0x5cc] sm:$0xf]
    %v415 = vld [vmem:[%s1 + $0x5d0] sm:$0xf]
    %v416 = vld [vmem:[%s1 + $0x5d4] sm:$0xf]
    %v417 = vld [vmem:[%s1 + $0x5d8] sm:$0xf]
    %v418 = vld [vmem:[%s1 + $0x5dc] sm:$0xf]
    %v419 = vld [vmem:[%s1 + $0x5e0] sm:$0xf]
    %v420 = vld [vmem:[%s1 + $0x5e4] sm:$0xf]
    %v421 = vld [vmem:[%s1 + $0x5e8] sm:$0xf]
    %v422 = vld [vmem:[%s1 + $0x5ec] sm:$0xf]
    %v423 = vld [vmem:[%s1 + $0x5f0] sm:$0xf]
    %v424 = vld [vmem:[%s1 + $0x5f4] sm:$0xf]
    %v425 = vld [vmem:[%s1 + $0x5f8] sm:$0xf]
    %v426 = vld [vmem:[%s1 + $0x5fc] sm:$0xf]
    %v427 = vld [vmem:[%s1 + $0x600] sm:$0xf]
    %v428 = vld [vmem:[%s1 + $0x604] sm:$0xf]
    %v429 = vld [vmem:[%s1 + $0x608] sm:$0xf]
    %v430 = vld [vmem:[%s1 + $0x60c] sm:$0xf]
    %v431 = vld [vmem:[%s1 + $0x610] sm:$0xf]
    %v432 = vld [vmem:[%s1 + $0x614] sm:$0xf]
    %v433 = vld [vmem:[%s1 + $0x618] sm:$0xf]
    %v434 = vld [vmem:[%s1 + $0x61c] sm:$0xf]
    %v435 = vld [vmem:[%s1 + $0x620] sm:$0xf]
    %v436 = vld [vmem:[%s1 + $0x624] sm:$0xf]
    %v437 = vld [vmem:[%s1 + $0x628] sm:$0xf]
    %v438 = vld [vmem:[%s1 + $0x62c] sm:$0xf]
    %v439 = vld [vmem:[%s1 + $0x630] sm:$0xf]
    %v440 = vld [vmem:[%s1 + $0x634] sm:$0xf]
    %v441 = vld [vmem:[%s1 + $0x638] sm:$0xf]
    %v442 = vld [vmem:[%s1 + $0x63c] sm:$0xf]
    %v443 = vld [vmem:[%s1 + $0x640] sm:$0xf]
    %v444 = vld [vmem:[%s1 + $0x644] sm:$0xf]
    %v445 = vld [vmem:[%s1 + $0x648] sm:$0xf]
    %v446 = vld [vmem:[%s1 + $0x64c] sm:$0xf]
    %v447 = vld [vmem:[%s1 + $0x650] sm:$0xf]
    %v448 = vld [vmem:[%s1 + $0x654] sm:$0xf]
    %v449 = vld [vmem:[%s1 + $0x658] sm:$0xf]
    %v450 = vld [vmem:[%s1 + $0x65c] sm:$0xf]
    %v451 = vld [vmem:[%s1 + $0x660] sm:$0xf]
    %v452 = vld [vmem:[%s1 + $0x664] sm:$0xf]
    %v453 = vld [vmem:[%s1 + $0x668] sm:$0xf]
    %v454 = vld [vmem:[%s1 + $0x66c] sm:$0xf]
    %v455 = vld [vmem:[%s1 + $0x670] sm:$0xf]
    %v456 = vld [vmem:[%s1 + $0x674] sm:$0xf]
    %v457 = vld [vmem:[%s1 + $0x678] sm:$0xf]
    %v458 = vld [vmem:[%s1 + $0x67c] sm:$0xf]
    %v459 = vld [vmem:[%s1 + $0x680] sm:$0xf]
    %v460 = vld [vmem:[%s1 + $0x684] sm:$0xf]
    %v461 = vld [vmem:[%s1 + $0x688] sm:$0xf]
    %v462 = vld [vmem:[%s1 + $0x68c] sm:$0xf]
    %v463 = vld [vmem:[%s1 + $0x690] sm:$0xf]
    %v464 = vld [vmem:[%s1 + $0x694] sm:$0xf]
    %v465 = vld [vmem:[%s1 + $0x698] sm:$0xf]
    %v466 = vld [vmem:[%s1 + $0x69c] sm:$0xf]
    %v467 = vld [vmem:[%s1 + $0x6a0] sm:$0xf]
    %v468 = vld [vmem:[%s1 + $0x6a4] sm:$0xf]
    %v469 = vld [vmem:[%s1 + $0x6a8] sm:$0xf]
    %v470 = vld [vmem:[%s1 + $0x6ac] sm:$0xf]
    %v471 = vld [vmem:[%s1 + $0x6b0] sm:$0xf]
    %v472 = vld [vmem:[%s1 + $0x6b4] sm:$0xf]
    %v473 = vld [vmem:[%s1 + $0x6b8] sm:$0xf]
    %v474 = vld [vmem:[%s1 + $0x6bc] sm:$0xf]
    %v475 = vld [vmem:[%s1 + $0x6c0] sm:$0xf]
    %v476 = vld [vmem:[%s1 + $0x6c4] sm:$0xf]
    %v477 = vld [vmem:[%s1 + $0x6c8] sm:$0xf]
    %v478 = vld [vmem:[%s1 + $0x6cc] sm:$0xf]
    %v479 = vld [vmem:[%s1 + $0x6d0] sm:$0xf]
    %v480 = vld [vmem:[%s1 + $0x6d4] sm:$0xf]
    %v481 = vld [vmem:[%s1 + $0x6d8] sm:$0xf]
    %v482 = vld [vmem:[%s1 + $0x6dc] sm:$0xf]
    %v483 = vld [vmem:[%s1 + $0x6e0] sm:$0xf]
    %v484 = vld [vmem:[%s1 + $0x6e4] sm:$0xf]
    %v485 = vld [vmem:[%s1 + $0x6e8] sm:$0xf]
    %v486 = vld [vmem:[%s1 + $0x6ec] sm:$0xf]
    %v487 = vld [vmem:[%s1 + $0x6f0] sm:$0xf]
    %v488 = vld [vmem:[%s1 + $0x6f4] sm:$0xf]
    %v489 = vld [vmem:[%s1 + $0x6f8] sm:$0xf]
    %v490 = vld [vmem:[%s1 + $0x6fc] sm:$0xf]
    %v491 = vld [vmem:[%s1 + $0x700] sm:$0xf]
    %v492 = vld [vmem:[%s1 + $0x704] sm:$0xf]
    %v493 = vld [vmem:[%s1 + $0x708] sm:$0xf]
    %v494 = vld [vmem:[%s1 + $0x70c] sm:$0xf]
    %v495 = vld [vmem:[%s1 + $0x710] sm:$0xf]
    %v496 = vld [vmem:[%s1 + $0x714] sm:$0xf]
    %v497 = vld [vmem:[%s1 + $0x718] sm:$0xf]
    %v498 = vld [vmem:[%s1 + $0x71c] sm:$0xf]
    %v499 = vld [vmem:[%s1 + $0x720] sm:$0xf]
    %v500 = vld [vmem:[%s1 + $0x724] sm:$0xf]
    %v501 = vld [vmem:[%s1 + $0x728] sm:$0xf]
    %v502 = vld [vmem:[%s1 + $0x72c] sm:$0xf]
    %v503 = vld [vmem:[%s1 + $0x730] sm:$0xf]
    %v504 = vld [vmem:[%s1 + $0x734] sm:$0xf]
    %v505 = vld [vmem:[%s1 + $0x738] sm:$0xf]
    %v506 = vld [vmem:[%s1 + $0x73c] sm:$0xf]
    %v507 = vld [vmem:[%s1 + $0x740] sm:$0xf]
    %v508 = vld [vmem:[%s1 + $0x744] sm:$0xf]
    %v509 = vld [vmem:[%s1 + $0x748] sm:$0xf]
    %v510 = vld [vmem:[%s1 + $0x74c] sm:$0xf]
    %v511 = vld [vmem:[%s1 + $0x750] sm:$0xf]
    %v512 = vld [vmem:[%s1 + $0x754] sm:$0xf]
    %v513 = vld [vmem:[%s1 + $0x758] sm:$0xf]
    %v514 = vld [vmem:[%s1 + $0x75c] sm:$0xf]
    %v515 = vld [vmem:[%s1 + $0x760] sm:$0xf]
    %v516 = vld [vmem:[%s1 + $0x764] sm:$0xf]
    %v517 = vld [vmem:[%s1 + $0x768] sm:$0xf]
    %v518 = vld [vmem:[%s1 + $0x76c] sm:$0xf]
    %v519 = vld [vmem:[%s1 + $0x770] sm:$0xf]
    %v520 = vld [vmem:[%s1 + $0x774] sm:$0xf]
    %v521 = vld [vmem:[%s1 + $0x778] sm:$0xf]
    %v522 = vld [vmem:[%s1 + $0x77c] sm:$0xf]
    %v523 = vld [vmem:[%s1 + $0x780] sm:$0xf]
    %v524 = vld [vmem:[%s1 + $0x784] sm:$0xf]
    %v525 = vld [vmem:[%s1 + $0x788] sm:$0xf]
    %v526 = vld [vmem:[%s1 + $0x78c] sm:$0xf]
    %v527 = vld [vmem:[%s1 + $0x790] sm:$0xf]
    %v528 = vld [vmem:[%s1 + $0x794] sm:$0xf]
    %v529 = vld [vmem:[%s1 + $0x798] sm:$0xf]
    %v530 = vld [vmem:[%s1 + $0x79c] sm:$0xf]
    %v531 = vld [vmem:[%s1 + $0x7a0] sm:$0xf]
    %v532 = vld [vmem:[%s1 + $0x7a4] sm:$0xf]
    %v533 = vld [vmem:[%s1 + $0x7a8] sm:$0xf]
    %v534 = vld [vmem:[%s1 + $0x7ac] sm:$0xf]
    %v535 = vld [vmem:[%s1 + $0x7b0] sm:$0xf]
    %v536 = vld [vmem:[%s1 + $0x7b4] sm:$0xf]
    %v537 = vld [vmem:[%s1 + $0x7b8] sm:$0xf]
    %v538 = vld [vmem:[%s1 + $0x7bc] sm:$0xf]
    %v539 = vld [vmem:[%s1 + $0x7c0] sm:$0xf]
    %v540 = vld [vmem:[%s1 + $0x7c4] sm:$0xf]
    %v541 = vld [vmem:[%s1 + $0x7c8] sm:$0xf]
    %v542 = vld [vmem:[%s1 + $0x7cc] sm:$0xf]
    %v543 = vld [vmem:[%s1 + $0x7d0] sm:$0xf]
    %v544 = vld [vmem:[%s1 + $0x7d4] sm:$0xf]
    %v545 = vld [vmem:[%s1 + $0x7d8] sm:$0xf]
    %v546 = vld [vmem:[%s1 + $0x7dc] sm:$0xf]
    %v547 = vld [vmem:[%s1 + $0x7e0] sm:$0xf]
    %v548 = vld [vmem:[%s1 + $0x7e4] sm:$0xf]
    %v549 = vld [vmem:[%s1 + $0x7e8] sm:$0xf]
    %v550 = vld [vmem:[%s1 + $0x7ec] sm:$0xf]
    %v551 = vld [vmem:[%s1 + $0x7f0] sm:$0xf]
    %v552 = vld [vmem:[%s1 + $0x7f4] sm:$0xf]
    %v553 = vld [vmem:[%s1 + $0x7f8] sm:$0xf]
    %v554 = vld [vmem:[%s1 + $0x7fc] sm:$0xf]
    %v555 = vld [vmem:[%s1 + $0x800] sm:$0x3]
    %v556 = vld [vmem:[#allocation2] sm:$0x3]
    %v566 = vcombine.high %v34, %v34
    %v568 = vunpack.c.l.s4 1983009808
    %v569 = vunpack.c.0.s8 %v568
    %v570 = vlaneseq
    %v571 = vshrl.u32 %v570, 7
    %v572 = vsub.s32 %v569, %v571
    %v573 = vrot.slane %v34, %v572
    %v575 = vunpack.c.l.s4 1983009808
    %v576 = vunpack.c.0.s8 %v575
    %v577 = vlaneseq
    %v578 = vshrl.u32 %v577, 7
    %v579 = vsub.s32 %v576, %v578
    %v580 = vrot.slane %v566, %v579
    %v581 = vcombine.high %v573, %v573
    %v582 = vcombine.high %v580, %v580
    %v583 = vcombine.high %v35, %v35
    %v585 = vunpack.c.l.s4 1983009808
    %v586 = vunpack.c.0.s8 %v585
    %v587 = vlaneseq
    %v588 = vshrl.u32 %v587, 7
    %v589 = vsub.s32 %v586, %v588
    %v590 = vrot.slane %v35, %v589
    %v592 = vunpack.c.l.s4 1983009808
    %v593 = vunpack.c.0.s8 %v592
    %v594 = vlaneseq
    %v595 = vshrl.u32 %v594, 7
    %v596 = vsub.s32 %v593, %v595
    %v597 = vrot.slane %v583, %v596
    %v598 = vcombine.high %v590, %v590
    %v599 = vcombine.high %v597, %v597
    %v600 = vcombine.high %v36, %v36
    %v602 = vunpack.c.l.s4 1983009808
    %v603 = vunpack.c.0.s8 %v602
    %v604 = vlaneseq
    %v605 = vshrl.u32 %v604, 7
    %v606 = vsub.s32 %v603, %v605
    %v607 = vrot.slane %v36, %v606
    %v609 = vunpack.c.l.s4 1983009808
    %v610 = vunpack.c.0.s8 %v609
    %v611 = vlaneseq
    %v612 = vshrl.u32 %v611, 7
    %v613 = vsub.s32 %v610, %v612
    %v614 = vrot.slane %v600, %v613
    %v615 = vcombine.high %v607, %v607
    %v616 = vcombine.high %v614, %v614
    %v617 = vcombine.high %v37, %v37
    %v619 = vunpack.c.l.s4 1983009808
    %v620 = vunpack.c.0.s8 %v619
    %v621 = vlaneseq
    %v622 = vshrl.u32 %v621, 7
    %v623 = vsub.s32 %v620, %v622
    %v624 = vrot.slane %v37, %v623
    %v626 = vunpack.c.l.s4 1983009808
    %v627 = vunpack.c.0.s8 %v626
    %v628 = vlaneseq
    %v629 = vshrl.u32 %v628, 7
    %v630 = vsub.s32 %v627, %v629
    %v631 = vrot.slane %v617, %v630
    %v632 = vcombine.high %v624, %v624
    %v633 = vcombine.high %v631, %v631
    %v634 = vcombine.high %v38, %v38
    %v636 = vunpack.c.l.s4 1983009808
    %v637 = vunpack.c.0.s8 %v636
    %v638 = vlaneseq
    %v639 = vshrl.u32 %v638, 7
    %v640 = vsub.s32 %v637, %v639
    %v641 = vrot.slane %v38, %v640
    %v643 = vunpack.c.l.s4 1983009808
    %v644 = vunpack.c.0.s8 %v643
    %v645 = vlaneseq
    %v646 = vshrl.u32 %v645, 7
    %v647 = vsub.s32 %v644, %v646
    %v648 = vrot.slane %v634, %v647
    %v649 = vcombine.high %v641, %v641
    %v650 = vcombine.high %v648, %v648
    %v651 = vcombine.high %v39, %v39
    %v653 = vunpack.c.l.s4 1983009808
    %v654 = vunpack.c.0.s8 %v653
    %v655 = vlaneseq
    %v656 = vshrl.u32 %v655, 7
    %v657 = vsub.s32 %v654, %v656
    %v658 = vrot.slane %v39, %v657
    %v660 = vunpack.c.l.s4 1983009808
    %v661 = vunpack.c.0.s8 %v660
    %v662 = vlaneseq
    %v663 = vshrl.u32 %v662, 7
    %v664 = vsub.s32 %v661, %v663
    %v665 = vrot.slane %v651, %v664
    %v666 = vcombine.high %v658, %v658
    %v667 = vcombine.high %v665, %v665
    %v668 = vcombine.high %v40, %v40
    %v670 = vunpack.c.l.s4 1983009808
    %v671 = vunpack.c.0.s8 %v670
    %v672 = vlaneseq
    %v673 = vshrl.u32 %v672, 7
    %v674 = vsub.s32 %v671, %v673
    %v675 = vrot.slane %v40, %v674
    %v677 = vunpack.c.l.s4 1983009808
    %v678 = vunpack.c.0.s8 %v677
    %v679 = vlaneseq
    %v680 = vshrl.u32 %v679, 7
    %v681 = vsub.s32 %v678, %v680
    %v682 = vrot.slane %v668, %v681
    %v683 = vcombine.high %v675, %v675
    %v684 = vcombine.high %v682, %v682
    %v685 = vcombine.high %v41, %v41
    %v687 = vunpack.c.l.s4 1983009808
    %v688 = vunpack.c.0.s8 %v687
    %v689 = vlaneseq
    %v690 = vshrl.u32 %v689, 7
    %v691 = vsub.s32 %v688, %v690
    %v692 = vrot.slane %v41, %v691
    %v694 = vunpack.c.l.s4 1983009808
    %v695 = vunpack.c.0.s8 %v694
    %v696 = vlaneseq
    %v697 = vshrl.u32 %v696, 7
    %v698 = vsub.s32 %v695, %v697
    %v699 = vrot.slane %v685, %v698
    %v700 = vcombine.high %v692, %v692
    %v701 = vcombine.high %v699, %v699
    %v703 = vunpack.c.l.s4 1983009808
    %v704 = vunpack.c.0.s8 %v703
    %v705 = vlaneseq
    %v706 = vshrl.u32 %v705, 7
    %v707 = vsub.s32 %v704, %v706
    %v708 = vrot.slane %v42, %v707
    %v742 = vpack.c.bf16 %v573, %v573
    %v743 = vpack.c.bf16 %v581, %v581
    %v744 = vpack.c.bf16 %v580, %v580
    %v745 = vpack.c.bf16 %v582, %v582
    %v746 = vpack.c.bf16 %v590, %v590
    %v747 = vpack.c.bf16 %v598, %v598
    %v748 = vpack.c.bf16 %v597, %v597
    %v749 = vpack.c.bf16 %v599, %v599
    %v750 = vpack.c.bf16 %v607, %v607
    %v751 = vpack.c.bf16 %v615, %v615
    %v752 = vpack.c.bf16 %v614, %v614
    %v753 = vpack.c.bf16 %v616, %v616
    %v754 = vpack.c.bf16 %v624, %v624
    %v755 = vpack.c.bf16 %v632, %v632
    %v756 = vpack.c.bf16 %v631, %v631
    %v757 = vpack.c.bf16 %v633, %v633
    %v758 = vpack.c.bf16 %v641, %v641
    %v759 = vpack.c.bf16 %v649, %v649
    %v760 = vpack.c.bf16 %v648, %v648
    %v761 = vpack.c.bf16 %v650, %v650
    %v762 = vpack.c.bf16 %v658, %v658
    %v763 = vpack.c.bf16 %v666, %v666
    %v764 = vpack.c.bf16 %v665, %v665
    %v765 = vpack.c.bf16 %v667, %v667
    %v766 = vpack.c.bf16 %v675, %v675
    %v767 = vpack.c.bf16 %v683, %v683
    %v768 = vpack.c.bf16 %v682, %v682
    %v769 = vpack.c.bf16 %v684, %v684
    %v770 = vpack.c.bf16 %v692, %v692
    %v771 = vpack.c.bf16 %v700, %v700
    %v772 = vpack.c.bf16 %v699, %v699
    %v773 = vpack.c.bf16 %v701, %v701
    %v774 = vpack.c.bf16 %v708, %v708
    %v1288 = vunpack.c.l.b16 %v43
    %v1289 = vunpack.c.l.b16 %v44
    %v1290 = vunpack.c.l.b16 %v45
    %v1291 = vunpack.c.l.b16 %v46
    %v1292 = vunpack.c.l.b16 %v47
    %v1293 = vunpack.c.l.b16 %v48
    %v1294 = vunpack.c.l.b16 %v49
    %v1295 = vunpack.c.l.b16 %v50
    %v1296 = vunpack.c.l.b16 %v51
    %v1297 = vunpack.c.l.b16 %v52
    %v1298 = vunpack.c.l.b16 %v53
    %v1299 = vunpack.c.l.b16 %v54
    %v1300 = vunpack.c.l.b16 %v55
    %v1301 = vunpack.c.l.b16 %v56
    %v1302 = vunpack.c.l.b16 %v57
    %v1303 = vunpack.c.l.b16 %v58
    %v1304 = vunpack.c.l.b16 %v59
    %v1305 = vunpack.c.l.b16 %v60
    %v1306 = vunpack.c.l.b16 %v61
    %v1307 = vunpack.c.l.b16 %v62
    %v1308 = vunpack.c.l.b16 %v63
    %v1309 = vunpack.c.l.b16 %v64
    %v1310 = vunpack.c.l.b16 %v65
    %v1311 = vunpack.c.l.b16 %v66
    %v1312 = vunpack.c.l.b16 %v67
    %v1313 = vunpack.c.l.b16 %v68
    %v1314 = vunpack.c.l.b16 %v69
    %v1315 = vunpack.c.l.b16 %v70
    %v1316 = vunpack.c.l.b16 %v71
    %v1317 = vunpack.c.l.b16 %v72
    %v1318 = vunpack.c.l.b16 %v73
    %v1319 = vunpack.c.l.b16 %v74
    %v1320 = vunpack.c.l.b16 %v75
    %v1321 = vunpack.c.l.b16 %v76
    %v1322 = vunpack.c.l.b16 %v77
    %v1323 = vunpack.c.l.b16 %v78
    %v1324 = vunpack.c.l.b16 %v79
    %v1325 = vunpack.c.l.b16 %v80
    %v1326 = vunpack.c.l.b16 %v81
    %v1327 = vunpack.c.l.b16 %v82
    %v1328 = vunpack.c.l.b16 %v83
    %v1329 = vunpack.c.l.b16 %v84
    %v1330 = vunpack.c.l.b16 %v85
    %v1331 = vunpack.c.l.b16 %v86
    %v1332 = vunpack.c.l.b16 %v87
    %v1333 = vunpack.c.l.b16 %v88
    %v1334 = vunpack.c.l.b16 %v89
    %v1335 = vunpack.c.l.b16 %v90
    %v1336 = vunpack.c.l.b16 %v91
    %v1337 = vunpack.c.l.b16 %v92
    %v1338 = vunpack.c.l.b16 %v93
    %v1339 = vunpack.c.l.b16 %v94
    %v1340 = vunpack.c.l.b16 %v95
    %v1341 = vunpack.c.l.b16 %v96
    %v1342 = vunpack.c.l.b16 %v97
    %v1343 = vunpack.c.l.b16 %v98
    %v1344 = vunpack.c.l.b16 %v99
    %v1345 = vunpack.c.l.b16 %v100
    %v1346 = vunpack.c.l.b16 %v101
    %v1347 = vunpack.c.l.b16 %v102
    %v1348 = vunpack.c.l.b16 %v103
    %v1349 = vunpack.c.l.b16 %v104
    %v1350 = vunpack.c.l.b16 %v105
    %v1351 = vunpack.c.l.b16 %v106
    %v1352 = vunpack.c.l.b16 %v107
    %v1353 = vunpack.c.l.b16 %v108
    %v1354 = vunpack.c.l.b16 %v109
    %v1355 = vunpack.c.l.b16 %v110
    %v1356 = vunpack.c.l.b16 %v111
    %v1357 = vunpack.c.l.b16 %v112
    %v1358 = vunpack.c.l.b16 %v113
    %v1359 = vunpack.c.l.b16 %v114
    %v1360 = vunpack.c.l.b16 %v115
    %v1361 = vunpack.c.l.b16 %v116
    %v1362 = vunpack.c.l.b16 %v117
    %v1363 = vunpack.c.l.b16 %v118
    %v1364 = vunpack.c.l.b16 %v119
    %v1365 = vunpack.c.l.b16 %v120
    %v1366 = vunpack.c.l.b16 %v121
    %v1367 = vunpack.c.l.b16 %v122
    %v1368 = vunpack.c.l.b16 %v123
    %v1369 = vunpack.c.l.b16 %v124
    %v1370 = vunpack.c.l.b16 %v125
    %v1371 = vunpack.c.l.b16 %v126
    %v1372 = vunpack.c.l.b16 %v127
    %v1373 = vunpack.c.l.b16 %v128
    %v1374 = vunpack.c.l.b16 %v129
    %v1375 = vunpack.c.l.b16 %v130
    %v1376 = vunpack.c.l.b16 %v131
    %v1377 = vunpack.c.l.b16 %v132
    %v1378 = vunpack.c.l.b16 %v133
    %v1379 = vunpack.c.l.b16 %v134
    %v1380 = vunpack.c.l.b16 %v135
    %v1381 = vunpack.c.l.b16 %v136
    %v1382 = vunpack.c.l.b16 %v137
    %v1383 = vunpack.c.l.b16 %v138
    %v1384 = vunpack.c.l.b16 %v139
    %v1385 = vunpack.c.l.b16 %v140
    %v1386 = vunpack.c.l.b16 %v141
    %v1387 = vunpack.c.l.b16 %v142
    %v1388 = vunpack.c.l.b16 %v143
    %v1389 = vunpack.c.l.b16 %v144
    %v1390 = vunpack.c.l.b16 %v145
    %v1391 = vunpack.c.l.b16 %v146
    %v1392 = vunpack.c.l.b16 %v147
    %v1393 = vunpack.c.l.b16 %v148
    %v1394 = vunpack.c.l.b16 %v149
    %v1395 = vunpack.c.l.b16 %v150
    %v1396 = vunpack.c.l.b16 %v151
    %v1397 = vunpack.c.l.b16 %v152
    %v1398 = vunpack.c.l.b16 %v153
    %v1399 = vunpack.c.l.b16 %v154
    %v1400 = vunpack.c.l.b16 %v155
    %v1401 = vunpack.c.l.b16 %v156
    %v1402 = vunpack.c.l.b16 %v157
    %v1403 = vunpack.c.l.b16 %v158
    %v1404 = vunpack.c.l.b16 %v159
    %v1405 = vunpack.c.l.b16 %v160
    %v1406 = vunpack.c.l.b16 %v161
    %v1407 = vunpack.c.l.b16 %v162
    %v1408 = vunpack.c.l.b16 %v163
    %v1409 = vunpack.c.l.b16 %v164
    %v1410 = vunpack.c.l.b16 %v165
    %v1411 = vunpack.c.l.b16 %v166
    %v1412 = vunpack.c.l.b16 %v167
    %v1413 = vunpack.c.l.b16 %v168
    %v1414 = vunpack.c.l.b16 %v169
    %v1415 = vunpack.c.l.b16 %v170
    %v1416 = vunpack.c.l.b16 %v171
    %v1417 = vunpack.c.l.b16 %v172
    %v1418 = vunpack.c.l.b16 %v173
    %v1419 = vunpack.c.l.b16 %v174
    %v1420 = vunpack.c.l.b16 %v175
    %v1421 = vunpack.c.l.b16 %v176
    %v1422 = vunpack.c.l.b16 %v177
    %v1423 = vunpack.c.l.b16 %v178
    %v1424 = vunpack.c.l.b16 %v179
    %v1425 = vunpack.c.l.b16 %v180
    %v1426 = vunpack.c.l.b16 %v181
    %v1427 = vunpack.c.l.b16 %v182
    %v1428 = vunpack.c.l.b16 %v183
    %v1429 = vunpack.c.l.b16 %v184
    %v1430 = vunpack.c.l.b16 %v185
    %v1431 = vunpack.c.l.b16 %v186
    %v1432 = vunpack.c.l.b16 %v187
    %v1433 = vunpack.c.l.b16 %v188
    %v1434 = vunpack.c.l.b16 %v189
    %v1435 = vunpack.c.l.b16 %v190
    %v1436 = vunpack.c.l.b16 %v191
    %v1437 = vunpack.c.l.b16 %v192
    %v1438 = vunpack.c.l.b16 %v193
    %v1439 = vunpack.c.l.b16 %v194
    %v1440 = vunpack.c.l.b16 %v195
    %v1441 = vunpack.c.l.b16 %v196
    %v1442 = vunpack.c.l.b16 %v197
    %v1443 = vunpack.c.l.b16 %v198
    %v1444 = vunpack.c.l.b16 %v199
    %v1445 = vunpack.c.l.b16 %v200
    %v1446 = vunpack.c.l.b16 %v201
    %v1447 = vunpack.c.l.b16 %v202
    %v1448 = vunpack.c.l.b16 %v203
    %v1449 = vunpack.c.l.b16 %v204
    %v1450 = vunpack.c.l.b16 %v205
    %v1451 = vunpack.c.l.b16 %v206
    %v1452 = vunpack.c.l.b16 %v207
    %v1453 = vunpack.c.l.b16 %v208
    %v1454 = vunpack.c.l.b16 %v209
    %v1455 = vunpack.c.l.b16 %v210
    %v1456 = vunpack.c.l.b16 %v211
    %v1457 = vunpack.c.l.b16 %v212
    %v1458 = vunpack.c.l.b16 %v213
    %v1459 = vunpack.c.l.b16 %v214
    %v1460 = vunpack.c.l.b16 %v215
    %v1461 = vunpack.c.l.b16 %v216
    %v1462 = vunpack.c.l.b16 %v217
    %v1463 = vunpack.c.l.b16 %v218
    %v1464 = vunpack.c.l.b16 %v219
    %v1465 = vunpack.c.l.b16 %v220
    %v1466 = vunpack.c.l.b16 %v221
    %v1467 = vunpack.c.l.b16 %v222
    %v1468 = vunpack.c.l.b16 %v223
    %v1469 = vunpack.c.l.b16 %v224
    %v1470 = vunpack.c.l.b16 %v225
    %v1471 = vunpack.c.l.b16 %v226
    %v1472 = vunpack.c.l.b16 %v227
    %v1473 = vunpack.c.l.b16 %v228
    %v1474 = vunpack.c.l.b16 %v229
    %v1475 = vunpack.c.l.b16 %v230
    %v1476 = vunpack.c.l.b16 %v231
    %v1477 = vunpack.c.l.b16 %v232
    %v1478 = vunpack.c.l.b16 %v233
    %v1479 = vunpack.c.l.b16 %v234
    %v1480 = vunpack.c.l.b16 %v235
    %v1481 = vunpack.c.l.b16 %v236
    %v1482 = vunpack.c.l.b16 %v237
    %v1483 = vunpack.c.l.b16 %v238
    %v1484 = vunpack.c.l.b16 %v239
    %v1485 = vunpack.c.l.b16 %v240
    %v1486 = vunpack.c.l.b16 %v241
    %v1487 = vunpack.c.l.b16 %v242
    %v1488 = vunpack.c.l.b16 %v243
    %v1489 = vunpack.c.l.b16 %v244
    %v1490 = vunpack.c.l.b16 %v245
    %v1491 = vunpack.c.l.b16 %v246
    %v1492 = vunpack.c.l.b16 %v247
    %v1493 = vunpack.c.l.b16 %v248
    %v1494 = vunpack.c.l.b16 %v249
    %v1495 = vunpack.c.l.b16 %v250
    %v1496 = vunpack.c.l.b16 %v251
    %v1497 = vunpack.c.l.b16 %v252
    %v1498 = vunpack.c.l.b16 %v253
    %v1499 = vunpack.c.l.b16 %v254
    %v1500 = vunpack.c.l.b16 %v255
    %v1501 = vunpack.c.l.b16 %v256
    %v1502 = vunpack.c.l.b16 %v257
    %v1503 = vunpack.c.l.b16 %v258
    %v1504 = vunpack.c.l.b16 %v259
    %v1505 = vunpack.c.l.b16 %v260
    %v1506 = vunpack.c.l.b16 %v261
    %v1507 = vunpack.c.l.b16 %v262
    %v1508 = vunpack.c.l.b16 %v263
    %v1509 = vunpack.c.l.b16 %v264
    %v1510 = vunpack.c.l.b16 %v265
    %v1511 = vunpack.c.l.b16 %v266
    %v1512 = vunpack.c.l.b16 %v267
    %v1513 = vunpack.c.l.b16 %v268
    %v1514 = vunpack.c.l.b16 %v269
    %v1515 = vunpack.c.l.b16 %v270
    %v1516 = vunpack.c.l.b16 %v271
    %v1517 = vunpack.c.l.b16 %v272
    %v1518 = vunpack.c.l.b16 %v273
    %v1519 = vunpack.c.l.b16 %v274
    %v1520 = vunpack.c.l.b16 %v275
    %v1521 = vunpack.c.l.b16 %v276
    %v1522 = vunpack.c.l.b16 %v277
    %v1523 = vunpack.c.l.b16 %v278
    %v1524 = vunpack.c.l.b16 %v279
    %v1525 = vunpack.c.l.b16 %v280
    %v1526 = vunpack.c.l.b16 %v281
    %v1527 = vunpack.c.l.b16 %v282
    %v1528 = vunpack.c.l.b16 %v283
    %v1529 = vunpack.c.l.b16 %v284
    %v1530 = vunpack.c.l.b16 %v285
    %v1531 = vunpack.c.l.b16 %v286
    %v1532 = vunpack.c.l.b16 %v287
    %v1533 = vunpack.c.l.b16 %v288
    %v1534 = vunpack.c.l.b16 %v289
    %v1535 = vunpack.c.l.b16 %v290
    %v1536 = vunpack.c.l.b16 %v291
    %v1537 = vunpack.c.l.b16 %v292
    %v1538 = vunpack.c.l.b16 %v293
    %v1539 = vunpack.c.l.b16 %v294
    %v1540 = vunpack.c.l.b16 %v295
    %v1541 = vunpack.c.l.b16 %v296
    %v1542 = vunpack.c.l.b16 %v297
    %v1543 = vunpack.c.l.b16 %v298
    %v1544 = vunpack.c.l.b16 %v299
    %v1545 = vunpack.c.l.b16 %v300
    %v1546 = vunpack.c.l.b16 %v301
    %v1547 = vunpack.c.l.b16 %v302
    %v1548 = vunpack.c.l.b16 %v303
    %v1549 = vunpack.c.l.b16 %v304
    %v1550 = vunpack.c.l.b16 %v305
    %v1551 = vunpack.c.l.b16 %v306
    %v1552 = vunpack.c.l.b16 %v307
    %v1553 = vunpack.c.l.b16 %v308
    %v1554 = vunpack.c.l.b16 %v309
    %v1555 = vunpack.c.l.b16 %v310
    %v1556 = vunpack.c.l.b16 %v311
    %v1557 = vunpack.c.l.b16 %v312
    %v1558 = vunpack.c.l.b16 %v313
    %v1559 = vunpack.c.l.b16 %v314
    %v1560 = vunpack.c.l.b16 %v315
    %v1561 = vunpack.c.l.b16 %v316
    %v1562 = vunpack.c.l.b16 %v317
    %v1563 = vunpack.c.l.b16 %v318
    %v1564 = vunpack.c.l.b16 %v319
    %v1565 = vunpack.c.l.b16 %v320
    %v1566 = vunpack.c.l.b16 %v321
    %v1567 = vunpack.c.l.b16 %v322
    %v1568 = vunpack.c.l.b16 %v323
    %v1569 = vunpack.c.l.b16 %v324
    %v1570 = vunpack.c.l.b16 %v325
    %v1571 = vunpack.c.l.b16 %v326
    %v1572 = vunpack.c.l.b16 %v327
    %v1573 = vunpack.c.l.b16 %v328
    %v1574 = vunpack.c.l.b16 %v329
    %v1575 = vunpack.c.l.b16 %v330
    %v1576 = vunpack.c.l.b16 %v331
    %v1577 = vunpack.c.l.b16 %v332
    %v1578 = vunpack.c.l.b16 %v333
    %v1579 = vunpack.c.l.b16 %v334
    %v1580 = vunpack.c.l.b16 %v335
    %v1581 = vunpack.c.l.b16 %v336
    %v1582 = vunpack.c.l.b16 %v337
    %v1583 = vunpack.c.l.b16 %v338
    %v1584 = vunpack.c.l.b16 %v339
    %v1585 = vunpack.c.l.b16 %v340
    %v1586 = vunpack.c.l.b16 %v341
    %v1587 = vunpack.c.l.b16 %v342
    %v1588 = vunpack.c.l.b16 %v343
    %v1589 = vunpack.c.l.b16 %v344
    %v1590 = vunpack.c.l.b16 %v345
    %v1591 = vunpack.c.l.b16 %v346
    %v1592 = vunpack.c.l.b16 %v347
    %v1593 = vunpack.c.l.b16 %v348
    %v1594 = vunpack.c.l.b16 %v349
    %v1595 = vunpack.c.l.b16 %v350
    %v1596 = vunpack.c.l.b16 %v351
    %v1597 = vunpack.c.l.b16 %v352
    %v1598 = vunpack.c.l.b16 %v353
    %v1599 = vunpack.c.l.b16 %v354
    %v1600 = vunpack.c.l.b16 %v355
    %v1601 = vunpack.c.l.b16 %v356
    %v1602 = vunpack.c.l.b16 %v357
    %v1603 = vunpack.c.l.b16 %v358
    %v1604 = vunpack.c.l.b16 %v359
    %v1605 = vunpack.c.l.b16 %v360
    %v1606 = vunpack.c.l.b16 %v361
    %v1607 = vunpack.c.l.b16 %v362
    %v1608 = vunpack.c.l.b16 %v363
    %v1609 = vunpack.c.l.b16 %v364
    %v1610 = vunpack.c.l.b16 %v365
    %v1611 = vunpack.c.l.b16 %v366
    %v1612 = vunpack.c.l.b16 %v367
    %v1613 = vunpack.c.l.b16 %v368
    %v1614 = vunpack.c.l.b16 %v369
    %v1615 = vunpack.c.l.b16 %v370
    %v1616 = vunpack.c.l.b16 %v371
    %v1617 = vunpack.c.l.b16 %v372
    %v1618 = vunpack.c.l.b16 %v373
    %v1619 = vunpack.c.l.b16 %v374
    %v1620 = vunpack.c.l.b16 %v375
    %v1621 = vunpack.c.l.b16 %v376
    %v1622 = vunpack.c.l.b16 %v377
    %v1623 = vunpack.c.l.b16 %v378
    %v1624 = vunpack.c.l.b16 %v379
    %v1625 = vunpack.c.l.b16 %v380
    %v1626 = vunpack.c.l.b16 %v381
    %v1627 = vunpack.c.l.b16 %v382
    %v1628 = vunpack.c.l.b16 %v383
    %v1629 = vunpack.c.l.b16 %v384
    %v1630 = vunpack.c.l.b16 %v385
    %v1631 = vunpack.c.l.b16 %v386
    %v1632 = vunpack.c.l.b16 %v387
    %v1633 = vunpack.c.l.b16 %v388
    %v1634 = vunpack.c.l.b16 %v389
    %v1635 = vunpack.c.l.b16 %v390
    %v1636 = vunpack.c.l.b16 %v391
    %v1637 = vunpack.c.l.b16 %v392
    %v1638 = vunpack.c.l.b16 %v393
    %v1639 = vunpack.c.l.b16 %v394
    %v1640 = vunpack.c.l.b16 %v395
    %v1641 = vunpack.c.l.b16 %v396
    %v1642 = vunpack.c.l.b16 %v397
    %v1643 = vunpack.c.l.b16 %v398
    %v1644 = vunpack.c.l.b16 %v399
    %v1645 = vunpack.c.l.b16 %v400
    %v1646 = vunpack.c.l.b16 %v401
    %v1647 = vunpack.c.l.b16 %v402
    %v1648 = vunpack.c.l.b16 %v403
    %v1649 = vunpack.c.l.b16 %v404
    %v1650 = vunpack.c.l.b16 %v405
    %v1651 = vunpack.c.l.b16 %v406
    %v1652 = vunpack.c.l.b16 %v407
    %v1653 = vunpack.c.l.b16 %v408
    %v1654 = vunpack.c.l.b16 %v409
    %v1655 = vunpack.c.l.b16 %v410
    %v1656 = vunpack.c.l.b16 %v411
    %v1657 = vunpack.c.l.b16 %v412
    %v1658 = vunpack.c.l.b16 %v413
    %v1659 = vunpack.c.l.b16 %v414
    %v1660 = vunpack.c.l.b16 %v415
    %v1661 = vunpack.c.l.b16 %v416
    %v1662 = vunpack.c.l.b16 %v417
    %v1663 = vunpack.c.l.b16 %v418
    %v1664 = vunpack.c.l.b16 %v419
    %v1665 = vunpack.c.l.b16 %v420
    %v1666 = vunpack.c.l.b16 %v421
    %v1667 = vunpack.c.l.b16 %v422
    %v1668 = vunpack.c.l.b16 %v423
    %v1669 = vunpack.c.l.b16 %v424
    %v1670 = vunpack.c.l.b16 %v425
    %v1671 = vunpack.c.l.b16 %v426
    %v1672 = vunpack.c.l.b16 %v427
    %v1673 = vunpack.c.l.b16 %v428
    %v1674 = vunpack.c.l.b16 %v429
    %v1675 = vunpack.c.l.b16 %v430
    %v1676 = vunpack.c.l.b16 %v431
    %v1677 = vunpack.c.l.b16 %v432
    %v1678 = vunpack.c.l.b16 %v433
    %v1679 = vunpack.c.l.b16 %v434
    %v1680 = vunpack.c.l.b16 %v435
    %v1681 = vunpack.c.l.b16 %v436
    %v1682 = vunpack.c.l.b16 %v437
    %v1683 = vunpack.c.l.b16 %v438
    %v1684 = vunpack.c.l.b16 %v439
    %v1685 = vunpack.c.l.b16 %v440
    %v1686 = vunpack.c.l.b16 %v441
    %v1687 = vunpack.c.l.b16 %v442
    %v1688 = vunpack.c.l.b16 %v443
    %v1689 = vunpack.c.l.b16 %v444
    %v1690 = vunpack.c.l.b16 %v445
    %v1691 = vunpack.c.l.b16 %v446
    %v1692 = vunpack.c.l.b16 %v447
    %v1693 = vunpack.c.l.b16 %v448
    %v1694 = vunpack.c.l.b16 %v449
    %v1695 = vunpack.c.l.b16 %v450
    %v1696 = vunpack.c.l.b16 %v451
    %v1697 = vunpack.c.l.b16 %v452
    %v1698 = vunpack.c.l.b16 %v453
    %v1699 = vunpack.c.l.b16 %v454
    %v1700 = vunpack.c.l.b16 %v455
    %v1701 = vunpack.c.l.b16 %v456
    %v1702 = vunpack.c.l.b16 %v457
    %v1703 = vunpack.c.l.b16 %v458
    %v1704 = vunpack.c.l.b16 %v459
    %v1705 = vunpack.c.l.b16 %v460
    %v1706 = vunpack.c.l.b16 %v461
    %v1707 = vunpack.c.l.b16 %v462
    %v1708 = vunpack.c.l.b16 %v463
    %v1709 = vunpack.c.l.b16 %v464
    %v1710 = vunpack.c.l.b16 %v465
    %v1711 = vunpack.c.l.b16 %v466
    %v1712 = vunpack.c.l.b16 %v467
    %v1713 = vunpack.c.l.b16 %v468
    %v1714 = vunpack.c.l.b16 %v469
    %v1715 = vunpack.c.l.b16 %v470
    %v1716 = vunpack.c.l.b16 %v471
    %v1717 = vunpack.c.l.b16 %v472
    %v1718 = vunpack.c.l.b16 %v473
    %v1719 = vunpack.c.l.b16 %v474
    %v1720 = vunpack.c.l.b16 %v475
    %v1721 = vunpack.c.l.b16 %v476
    %v1722 = vunpack.c.l.b16 %v477
    %v1723 = vunpack.c.l.b16 %v478
    %v1724 = vunpack.c.l.b16 %v479
    %v1725 = vunpack.c.l.b16 %v480
    %v1726 = vunpack.c.l.b16 %v481
    %v1727 = vunpack.c.l.b16 %v482
    %v1728 = vunpack.c.l.b16 %v483
    %v1729 = vunpack.c.l.b16 %v484
    %v1730 = vunpack.c.l.b16 %v485
    %v1731 = vunpack.c.l.b16 %v486
    %v1732 = vunpack.c.l.b16 %v487
    %v1733 = vunpack.c.l.b16 %v488
    %v1734 = vunpack.c.l.b16 %v489
    %v1735 = vunpack.c.l.b16 %v490
    %v1736 = vunpack.c.l.b16 %v491
    %v1737 = vunpack.c.l.b16 %v492
    %v1738 = vunpack.c.l.b16 %v493
    %v1739 = vunpack.c.l.b16 %v494
    %v1740 = vunpack.c.l.b16 %v495
    %v1741 = vunpack.c.l.b16 %v496
    %v1742 = vunpack.c.l.b16 %v497
    %v1743 = vunpack.c.l.b16 %v498
    %v1744 = vunpack.c.l.b16 %v499
    %v1745 = vunpack.c.l.b16 %v500
    %v1746 = vunpack.c.l.b16 %v501
    %v1747 = vunpack.c.l.b16 %v502
    %v1748 = vunpack.c.l.b16 %v503
    %v1749 = vunpack.c.l.b16 %v504
    %v1750 = vunpack.c.l.b16 %v505
    %v1751 = vunpack.c.l.b16 %v506
    %v1752 = vunpack.c.l.b16 %v507
    %v1753 = vunpack.c.l.b16 %v508
    %v1754 = vunpack.c.l.b16 %v509
    %v1755 = vunpack.c.l.b16 %v510
    %v1756 = vunpack.c.l.b16 %v511
    %v1757 = vunpack.c.l.b16 %v512
    %v1758 = vunpack.c.l.b16 %v513
    %v1759 = vunpack.c.l.b16 %v514
    %v1760 = vunpack.c.l.b16 %v515
    %v1761 = vunpack.c.l.b16 %v516
    %v1762 = vunpack.c.l.b16 %v517
    %v1763 = vunpack.c.l.b16 %v518
    %v1764 = vunpack.c.l.b16 %v519
    %v1765 = vunpack.c.l.b16 %v520
    %v1766 = vunpack.c.l.b16 %v521
    %v1767 = vunpack.c.l.b16 %v522
    %v1768 = vunpack.c.l.b16 %v523
    %v1769 = vunpack.c.l.b16 %v524
    %v1770 = vunpack.c.l.b16 %v525
    %v1771 = vunpack.c.l.b16 %v526
    %v1772 = vunpack.c.l.b16 %v527
    %v1773 = vunpack.c.l.b16 %v528
    %v1774 = vunpack.c.l.b16 %v529
    %v1775 = vunpack.c.l.b16 %v530
    %v1776 = vunpack.c.l.b16 %v531
    %v1777 = vunpack.c.l.b16 %v532
    %v1778 = vunpack.c.l.b16 %v533
    %v1779 = vunpack.c.l.b16 %v534
    %v1780 = vunpack.c.l.b16 %v535
    %v1781 = vunpack.c.l.b16 %v536
    %v1782 = vunpack.c.l.b16 %v537
    %v1783 = vunpack.c.l.b16 %v538
    %v1784 = vunpack.c.l.b16 %v539
    %v1785 = vunpack.c.l.b16 %v540
    %v1786 = vunpack.c.l.b16 %v541
    %v1787 = vunpack.c.l.b16 %v542
    %v1788 = vunpack.c.l.b16 %v543
    %v1789 = vunpack.c.l.b16 %v544
    %v1790 = vunpack.c.l.b16 %v545
    %v1791 = vunpack.c.l.b16 %v546
    %v1792 = vunpack.c.l.b16 %v547
    %v1793 = vunpack.c.l.b16 %v548
    %v1794 = vunpack.c.l.b16 %v549
    %v1795 = vunpack.c.l.b16 %v550
    %v1796 = vunpack.c.l.b16 %v551
    %v1797 = vunpack.c.l.b16 %v552
    %v1798 = vunpack.c.l.b16 %v553
    %v1799 = vunpack.c.l.b16 %v554
    %v1800 = vunpack.c.l.b16 %v555
    %v1801 = vpack.c.b16 %v1289, %v1288
    %v1802 = vpack.c.b16 %v1291, %v1290
    %v1803 = vpack.c.b16 %v1293, %v1292
    %v1804 = vpack.c.b16 %v1295, %v1294
    %v1805 = vpack.c.b16 %v1297, %v1296
    %v1806 = vpack.c.b16 %v1299, %v1298
    %v1807 = vpack.c.b16 %v1301, %v1300
    %v1808 = vpack.c.b16 %v1303, %v1302
    %v1809 = vpack.c.b16 %v1305, %v1304
    %v1810 = vpack.c.b16 %v1307, %v1306
    %v1811 = vpack.c.b16 %v1309, %v1308
    %v1812 = vpack.c.b16 %v1311, %v1310
    %v1813 = vpack.c.b16 %v1313, %v1312
    %v1814 = vpack.c.b16 %v1315, %v1314
    %v1815 = vpack.c.b16 %v1317, %v1316
    %v1816 = vpack.c.b16 %v1319, %v1318
    %v1817 = vpack.c.b16 %v1321, %v1320
    %v1818 = vpack.c.b16 %v1323, %v1322
    %v1819 = vpack.c.b16 %v1325, %v1324
    %v1820 = vpack.c.b16 %v1327, %v1326
    %v1821 = vpack.c.b16 %v1329, %v1328
    %v1822 = vpack.c.b16 %v1331, %v1330
    %v1823 = vpack.c.b16 %v1333, %v1332
    %v1824 = vpack.c.b16 %v1335, %v1334
    %v1825 = vpack.c.b16 %v1337, %v1336
    %v1826 = vpack.c.b16 %v1339, %v1338
    %v1827 = vpack.c.b16 %v1341, %v1340
    %v1828 = vpack.c.b16 %v1343, %v1342
    %v1829 = vpack.c.b16 %v1345, %v1344
    %v1830 = vpack.c.b16 %v1347, %v1346
    %v1831 = vpack.c.b16 %v1349, %v1348
    %v1832 = vpack.c.b16 %v1351, %v1350
    %v1833 = vpack.c.b16 %v1353, %v1352
    %v1834 = vpack.c.b16 %v1355, %v1354
    %v1835 = vpack.c.b16 %v1357, %v1356
    %v1836 = vpack.c.b16 %v1359, %v1358
    %v1837 = vpack.c.b16 %v1361, %v1360
    %v1838 = vpack.c.b16 %v1363, %v1362
    %v1839 = vpack.c.b16 %v1365, %v1364
    %v1840 = vpack.c.b16 %v1367, %v1366
    %v1841 = vpack.c.b16 %v1369, %v1368
    %v1842 = vpack.c.b16 %v1371, %v1370
    %v1843 = vpack.c.b16 %v1373, %v1372
    %v1844 = vpack.c.b16 %v1375, %v1374
    %v1845 = vpack.c.b16 %v1377, %v1376
    %v1846 = vpack.c.b16 %v1379, %v1378
    %v1847 = vpack.c.b16 %v1381, %v1380
    %v1848 = vpack.c.b16 %v1383, %v1382
    %v1849 = vpack.c.b16 %v1385, %v1384
    %v1850 = vpack.c.b16 %v1387, %v1386
    %v1851 = vpack.c.b16 %v1389, %v1388
    %v1852 = vpack.c.b16 %v1391, %v1390
    %v1853 = vpack.c.b16 %v1393, %v1392
    %v1854 = vpack.c.b16 %v1395, %v1394
    %v1855 = vpack.c.b16 %v1397, %v1396
    %v1856 = vpack.c.b16 %v1399, %v1398
    %v1857 = vpack.c.b16 %v1401, %v1400
    %v1858 = vpack.c.b16 %v1403, %v1402
    %v1859 = vpack.c.b16 %v1405, %v1404
    %v1860 = vpack.c.b16 %v1407, %v1406
    %v1861 = vpack.c.b16 %v1409, %v1408
    %v1862 = vpack.c.b16 %v1411, %v1410
    %v1863 = vpack.c.b16 %v1413, %v1412
    %v1864 = vpack.c.b16 %v1415, %v1414
    %v1865 = vpack.c.b16 %v1417, %v1416
    %v1866 = vpack.c.b16 %v1419, %v1418
    %v1867 = vpack.c.b16 %v1421, %v1420
    %v1868 = vpack.c.b16 %v1423, %v1422
    %v1869 = vpack.c.b16 %v1425, %v1424
    %v1870 = vpack.c.b16 %v1427, %v1426
    %v1871 = vpack.c.b16 %v1429, %v1428
    %v1872 = vpack.c.b16 %v1431, %v1430
    %v1873 = vpack.c.b16 %v1433, %v1432
    %v1874 = vpack.c.b16 %v1435, %v1434
    %v1875 = vpack.c.b16 %v1437, %v1436
    %v1876 = vpack.c.b16 %v1439, %v1438
    %v1877 = vpack.c.b16 %v1441, %v1440
    %v1878 = vpack.c.b16 %v1443, %v1442
    %v1879 = vpack.c.b16 %v1445, %v1444
    %v1880 = vpack.c.b16 %v1447, %v1446
    %v1881 = vpack.c.b16 %v1449, %v1448
    %v1882 = vpack.c.b16 %v1451, %v1450
    %v1883 = vpack.c.b16 %v1453, %v1452
    %v1884 = vpack.c.b16 %v1455, %v1454
    %v1885 = vpack.c.b16 %v1457, %v1456
    %v1886 = vpack.c.b16 %v1459, %v1458
    %v1887 = vpack.c.b16 %v1461, %v1460
    %v1888 = vpack.c.b16 %v1463, %v1462
    %v1889 = vpack.c.b16 %v1465, %v1464
    %v1890 = vpack.c.b16 %v1467, %v1466
    %v1891 = vpack.c.b16 %v1469, %v1468
    %v1892 = vpack.c.b16 %v1471, %v1470
    %v1893 = vpack.c.b16 %v1473, %v1472
    %v1894 = vpack.c.b16 %v1475, %v1474
    %v1895 = vpack.c.b16 %v1477, %v1476
    %v1896 = vpack.c.b16 %v1479, %v1478
    %v1897 = vpack.c.b16 %v1481, %v1480
    %v1898 = vpack.c.b16 %v1483, %v1482
    %v1899 = vpack.c.b16 %v1485, %v1484
    %v1900 = vpack.c.b16 %v1487, %v1486
    %v1901 = vpack.c.b16 %v1489, %v1488
    %v1902 = vpack.c.b16 %v1491, %v1490
    %v1903 = vpack.c.b16 %v1493, %v1492
    %v1904 = vpack.c.b16 %v1495, %v1494
    %v1905 = vpack.c.b16 %v1497, %v1496
    %v1906 = vpack.c.b16 %v1499, %v1498
    %v1907 = vpack.c.b16 %v1501, %v1500
    %v1908 = vpack.c.b16 %v1503, %v1502
    %v1909 = vpack.c.b16 %v1505, %v1504
    %v1910 = vpack.c.b16 %v1507, %v1506
    %v1911 = vpack.c.b16 %v1509, %v1508
    %v1912 = vpack.c.b16 %v1511, %v1510
    %v1913 = vpack.c.b16 %v1513, %v1512
    %v1914 = vpack.c.b16 %v1515, %v1514
    %v1915 = vpack.c.b16 %v1517, %v1516
    %v1916 = vpack.c.b16 %v1519, %v1518
    %v1917 = vpack.c.b16 %v1521, %v1520
    %v1918 = vpack.c.b16 %v1523, %v1522
    %v1919 = vpack.c.b16 %v1525, %v1524
    %v1920 = vpack.c.b16 %v1527, %v1526
    %v1921 = vpack.c.b16 %v1529, %v1528
    %v1922 = vpack.c.b16 %v1531, %v1530
    %v1923 = vpack.c.b16 %v1533, %v1532
    %v1924 = vpack.c.b16 %v1535, %v1534
    %v1925 = vpack.c.b16 %v1537, %v1536
    %v1926 = vpack.c.b16 %v1539, %v1538
    %v1927 = vpack.c.b16 %v1541, %v1540
    %v1928 = vpack.c.b16 %v1543, %v1542
    %v1929 = vpack.c.b16 %v1545, %v1544
    %v1930 = vpack.c.b16 %v1547, %v1546
    %v1931 = vpack.c.b16 %v1549, %v1548
    %v1932 = vpack.c.b16 %v1551, %v1550
    %v1933 = vpack.c.b16 %v1553, %v1552
    %v1934 = vpack.c.b16 %v1555, %v1554
    %v1935 = vpack.c.b16 %v1557, %v1556
    %v1936 = vpack.c.b16 %v1559, %v1558
    %v1937 = vpack.c.b16 %v1561, %v1560
    %v1938 = vpack.c.b16 %v1563, %v1562
    %v1939 = vpack.c.b16 %v1565, %v1564
    %v1940 = vpack.c.b16 %v1567, %v1566
    %v1941 = vpack.c.b16 %v1569, %v1568
    %v1942 = vpack.c.b16 %v1571, %v1570
    %v1943 = vpack.c.b16 %v1573, %v1572
    %v1944 = vpack.c.b16 %v1575, %v1574
    %v1945 = vpack.c.b16 %v1577, %v1576
    %v1946 = vpack.c.b16 %v1579, %v1578
    %v1947 = vpack.c.b16 %v1581, %v1580
    %v1948 = vpack.c.b16 %v1583, %v1582
    %v1949 = vpack.c.b16 %v1585, %v1584
    %v1950 = vpack.c.b16 %v1587, %v1586
    %v1951 = vpack.c.b16 %v1589, %v1588
    %v1952 = vpack.c.b16 %v1591, %v1590
    %v1953 = vpack.c.b16 %v1593, %v1592
    %v1954 = vpack.c.b16 %v1595, %v1594
    %v1955 = vpack.c.b16 %v1597, %v1596
    %v1956 = vpack.c.b16 %v1599, %v1598
    %v1957 = vpack.c.b16 %v1601, %v1600
    %v1958 = vpack.c.b16 %v1603, %v1602
    %v1959 = vpack.c.b16 %v1605, %v1604
    %v1960 = vpack.c.b16 %v1607, %v1606
    %v1961 = vpack.c.b16 %v1609, %v1608
    %v1962 = vpack.c.b16 %v1611, %v1610
    %v1963 = vpack.c.b16 %v1613, %v1612
    %v1964 = vpack.c.b16 %v1615, %v1614
    %v1965 = vpack.c.b16 %v1617, %v1616
    %v1966 = vpack.c.b16 %v1619, %v1618
    %v1967 = vpack.c.b16 %v1621, %v1620
    %v1968 = vpack.c.b16 %v1623, %v1622
    %v1969 = vpack.c.b16 %v1625, %v1624
    %v1970 = vpack.c.b16 %v1627, %v1626
    %v1971 = vpack.c.b16 %v1629, %v1628
    %v1972 = vpack.c.b16 %v1631, %v1630
    %v1973 = vpack.c.b16 %v1633, %v1632
    %v1974 = vpack.c.b16 %v1635, %v1634
    %v1975 = vpack.c.b16 %v1637, %v1636
    %v1976 = vpack.c.b16 %v1639, %v1638
    %v1977 = vpack.c.b16 %v1641, %v1640
    %v1978 = vpack.c.b16 %v1643, %v1642
    %v1979 = vpack.c.b16 %v1645, %v1644
    %v1980 = vpack.c.b16 %v1647, %v1646
    %v1981 = vpack.c.b16 %v1649, %v1648
    %v1982 = vpack.c.b16 %v1651, %v1650
    %v1983 = vpack.c.b16 %v1653, %v1652
    %v1984 = vpack.c.b16 %v1655, %v1654
    %v1985 = vpack.c.b16 %v1657, %v1656
    %v1986 = vpack.c.b16 %v1659, %v1658
    %v1987 = vpack.c.b16 %v1661, %v1660
    %v1988 = vpack.c.b16 %v1663, %v1662
    %v1989 = vpack.c.b16 %v1665, %v1664
    %v1990 = vpack.c.b16 %v1667, %v1666
    %v1991 = vpack.c.b16 %v1669, %v1668
    %v1992 = vpack.c.b16 %v1671, %v1670
    %v1993 = vpack.c.b16 %v1673, %v1672
    %v1994 = vpack.c.b16 %v1675, %v1674
    %v1995 = vpack.c.b16 %v1677, %v1676
    %v1996 = vpack.c.b16 %v1679, %v1678
    %v1997 = vpack.c.b16 %v1681, %v1680
    %v1998 = vpack.c.b16 %v1683, %v1682
    %v1999 = vpack.c.b16 %v1685, %v1684
    %v2000 = vpack.c.b16 %v1687, %v1686
    %v2001 = vpack.c.b16 %v1689, %v1688
    %v2002 = vpack.c.b16 %v1691, %v1690
    %v2003 = vpack.c.b16 %v1693, %v1692
    %v2004 = vpack.c.b16 %v1695, %v1694
    %v2005 = vpack.c.b16 %v1697, %v1696
    %v2006 = vpack.c.b16 %v1699, %v1698
    %v2007 = vpack.c.b16 %v1701, %v1700
    %v2008 = vpack.c.b16 %v1703, %v1702
    %v2009 = vpack.c.b16 %v1705, %v1704
    %v2010 = vpack.c.b16 %v1707, %v1706
    %v2011 = vpack.c.b16 %v1709, %v1708
    %v2012 = vpack.c.b16 %v1711, %v1710
    %v2013 = vpack.c.b16 %v1713, %v1712
    %v2014 = vpack.c.b16 %v1715, %v1714
    %v2015 = vpack.c.b16 %v1717, %v1716
    %v2016 = vpack.c.b16 %v1719, %v1718
    %v2017 = vpack.c.b16 %v1721, %v1720
    %v2018 = vpack.c.b16 %v1723, %v1722
    %v2019 = vpack.c.b16 %v1725, %v1724
    %v2020 = vpack.c.b16 %v1727, %v1726
    %v2021 = vpack.c.b16 %v1729, %v1728
    %v2022 = vpack.c.b16 %v1731, %v1730
    %v2023 = vpack.c.b16 %v1733, %v1732
    %v2024 = vpack.c.b16 %v1735, %v1734
    %v2025 = vpack.c.b16 %v1737, %v1736
    %v2026 = vpack.c.b16 %v1739, %v1738
    %v2027 = vpack.c.b16 %v1741, %v1740
    %v2028 = vpack.c.b16 %v1743, %v1742
    %v2029 = vpack.c.b16 %v1745, %v1744
    %v2030 = vpack.c.b16 %v1747, %v1746
    %v2031 = vpack.c.b16 %v1749, %v1748
    %v2032 = vpack.c.b16 %v1751, %v1750
    %v2033 = vpack.c.b16 %v1753, %v1752
    %v2034 = vpack.c.b16 %v1755, %v1754
    %v2035 = vpack.c.b16 %v1757, %v1756
    %v2036 = vpack.c.b16 %v1759, %v1758
    %v2037 = vpack.c.b16 %v1761, %v1760
    %v2038 = vpack.c.b16 %v1763, %v1762
    %v2039 = vpack.c.b16 %v1765, %v1764
    %v2040 = vpack.c.b16 %v1767, %v1766
    %v2041 = vpack.c.b16 %v1769, %v1768
    %v2042 = vpack.c.b16 %v1771, %v1770
    %v2043 = vpack.c.b16 %v1773, %v1772
    %v2044 = vpack.c.b16 %v1775, %v1774
    %v2045 = vpack.c.b16 %v1777, %v1776
    %v2046 = vpack.c.b16 %v1779, %v1778
    %v2047 = vpack.c.b16 %v1781, %v1780
    %v2048 = vpack.c.b16 %v1783, %v1782
    %v2049 = vpack.c.b16 %v1785, %v1784
    %v2050 = vpack.c.b16 %v1787, %v1786
    %v2051 = vpack.c.b16 %v1789, %v1788
    %v2052 = vpack.c.b16 %v1791, %v1790
    %v2053 = vpack.c.b16 %v1793, %v1792
    %v2054 = vpack.c.b16 %v1795, %v1794
    %v2055 = vpack.c.b16 %v1797, %v1796
    %v2056 = vpack.c.b16 %v1799, %v1798
    %v2057 = vpack.c.b16 %v1800, %v1800
    %vm2314 = vcmask 31744
    %v2316 = vsel %vm2314, %v774, 0
    %vm2318 = vcmask 1041408
    %v2320 = vsel %vm2318, %v2057, 0
    %2322 = vmatprep.subr.bf16.mxu0 0
    %2323 = vmatpush1.bf16.msra.mxu0 %v1808
    %2324 = vmatprep.subr.bf16.mxu0 0
    %2325 = vmatpush1.bf16.msra.mxu0 %v1807
    %2326 = vmatprep.subr.bf16.mxu0 0
    %2327 = vmatpush1.bf16.msra.mxu0 %v1806
    %2328 = vmatprep.subr.bf16.mxu0 0
    %2329 = vmatpush1.bf16.msra.mxu0 %v1805
    %2330 = vmatprep.subr.bf16.mxu0 0
    %2331 = vmatpush1.bf16.msra.mxu0 %v1804
    %2332 = vmatprep.subr.bf16.mxu0 0
    %2333 = vmatpush1.bf16.msra.mxu0 %v1803
    %2334 = vmatprep.subr.bf16.mxu0 0
    %2335 = vmatpush1.bf16.msra.mxu0 %v1802
    %2336 = vmatprep.subr.bf16.mxu0 0
    %2337 = vmatpush1.bf16.msra.mxu0 %v1801
    %2338 = vmatprep.subr.bf16.mxu0 0
    %2339 = vmatpush2.bf16.msra.mxu0 %v1816
    %2340 = vmatprep.subr.bf16.mxu0 0
    %2341 = vmatpush2.bf16.msra.mxu0 %v1815
    %2342 = vmatprep.subr.bf16.mxu0 0
    %2343 = vmatpush2.bf16.msra.mxu0 %v1814
    %2344 = vmatprep.subr.bf16.mxu0 0
    %2345 = vmatpush2.bf16.msra.mxu0 %v1813
    %2346 = vmatprep.subr.bf16.mxu0 0
    %2347 = vmatpush2.bf16.msra.mxu0 %v1812
    %2348 = vmatprep.subr.bf16.mxu0 0
    %2349 = vmatpush2.bf16.msra.mxu0 %v1811
    %2350 = vmatprep.subr.bf16.mxu0 0
    %2351 = vmatpush2.bf16.msra.mxu0 %v1810
    %2352 = vmatprep.subr.bf16.mxu0 0
    %2353 = vmatpush2.bf16.msra.mxu0 %v1809
    %2354 = vmatprep.mubr.bf16.mxu0 %v743
    %2355 = vmatmul.mubr.bf16.gmra.mxu0 %v742
    %v2356 = vpop.f32.mrf.mxu0
    %v2357 = vadd.f32 0.0, %v2356
    %v2358 = vpop.f32.mrf.mxu0
    %v2359 = vpop.f32.mrf.mxu0
    %v2360 = vpop.f32.mrf.mxu0
    %2361 = vdwg.mxu0
    %2362 = vmatprep.subr.bf16.mxu0 0
    %2363 = vmatpush1.bf16.msra.mxu0 %v1824
    %2364 = vmatprep.subr.bf16.mxu0 0
    %2365 = vmatpush1.bf16.msra.mxu0 %v1823
    %2366 = vmatprep.subr.bf16.mxu0 0
    %2367 = vmatpush1.bf16.msra.mxu0 %v1822
    %2368 = vmatprep.subr.bf16.mxu0 0
    %2369 = vmatpush1.bf16.msra.mxu0 %v1821
    %2370 = vmatprep.subr.bf16.mxu0 0
    %2371 = vmatpush1.bf16.msra.mxu0 %v1820
    %2372 = vmatprep.subr.bf16.mxu0 0
    %2373 = vmatpush1.bf16.msra.mxu0 %v1819
    %2374 = vmatprep.subr.bf16.mxu0 0
    %2375 = vmatpush1.bf16.msra.mxu0 %v1818
    %2376 = vmatprep.subr.bf16.mxu0 0
    %2377 = vmatpush1.bf16.msra.mxu0 %v1817
    %2378 = vmatprep.subr.bf16.mxu0 0
    %2379 = vmatpush2.bf16.msra.mxu0 %v1832
    %2380 = vmatprep.subr.bf16.mxu0 0
    %2381 = vmatpush2.bf16.msra.mxu0 %v1831
    %2382 = vmatprep.subr.bf16.mxu0 0
    %2383 = vmatpush2.bf16.msra.mxu0 %v1830
    %2384 = vmatprep.subr.bf16.mxu0 0
    %2385 = vmatpush2.bf16.msra.mxu0 %v1829
    %2386 = vmatprep.subr.bf16.mxu0 0
    %2387 = vmatpush2.bf16.msra.mxu0 %v1828
    %2388 = vmatprep.subr.bf16.mxu0 0
    %2389 = vmatpush2.bf16.msra.mxu0 %v1827
    %2390 = vmatprep.subr.bf16.mxu0 0
    %2391 = vmatpush2.bf16.msra.mxu0 %v1826
    %2392 = vmatprep.subr.bf16.mxu0 0
    %2393 = vmatpush2.bf16.msra.mxu0 %v1825
    %2394 = vmatprep.mubr.bf16.mxu0 %v745
    %2395 = vmatmul.mubr.bf16.gmra.mxu0 %v744
    %v2396 = vpop.f32.mrf.mxu0
    %v2397 = vadd.f32 %v2357, %v2396
    %v2398 = vpop.f32.mrf.mxu0
    %v2399 = vpop.f32.mrf.mxu0
    %v2400 = vpop.f32.mrf.mxu0
    %2401 = vdwg.mxu0
    %2402 = vmatprep.subr.bf16.mxu0 0
    %2403 = vmatpush1.bf16.msra.mxu0 %v1840
    %2404 = vmatprep.subr.bf16.mxu0 0
    %2405 = vmatpush1.bf16.msra.mxu0 %v1839
    %2406 = vmatprep.subr.bf16.mxu0 0
    %2407 = vmatpush1.bf16.msra.mxu0 %v1838
    %2408 = vmatprep.subr.bf16.mxu0 0
    %2409 = vmatpush1.bf16.msra.mxu0 %v1837
    %2410 = vmatprep.subr.bf16.mxu0 0
    %2411 = vmatpush1.bf16.msra.mxu0 %v1836
    %2412 = vmatprep.subr.bf16.mxu0 0
    %2413 = vmatpush1.bf16.msra.mxu0 %v1835
    %2414 = vmatprep.subr.bf16.mxu0 0
    %2415 = vmatpush1.bf16.msra.mxu0 %v1834
    %2416 = vmatprep.subr.bf16.mxu0 0
    %2417 = vmatpush1.bf16.msra.mxu0 %v1833
    %2418 = vmatprep.subr.bf16.mxu0 0
    %2419 = vmatpush2.bf16.msra.mxu0 %v1848
    %2420 = vmatprep.subr.bf16.mxu0 0
    %2421 = vmatpush2.bf16.msra.mxu0 %v1847
    %2422 = vmatprep.subr.bf16.mxu0 0
    %2423 = vmatpush2.bf16.msra.mxu0 %v1846
    %2424 = vmatprep.subr.bf16.mxu0 0
    %2425 = vmatpush2.bf16.msra.mxu0 %v1845
    %2426 = vmatprep.subr.bf16.mxu0 0
    %2427 = vmatpush2.bf16.msra.mxu0 %v1844
    %2428 = vmatprep.subr.bf16.mxu0 0
    %2429 = vmatpush2.bf16.msra.mxu0 %v1843
    %2430 = vmatprep.subr.bf16.mxu0 0
    %2431 = vmatpush2.bf16.msra.mxu0 %v1842
    %2432 = vmatprep.subr.bf16.mxu0 0
    %2433 = vmatpush2.bf16.msra.mxu0 %v1841
    %2434 = vmatprep.mubr.bf16.mxu0 %v747
    %2435 = vmatmul.mubr.bf16.gmra.mxu0 %v746
    %v2436 = vpop.f32.mrf.mxu0
    %v2437 = vadd.f32 %v2397, %v2436
    %v2438 = vpop.f32.mrf.mxu0
    %v2439 = vpop.f32.mrf.mxu0
    %v2440 = vpop.f32.mrf.mxu0
    %2441 = vdwg.mxu0
    %2442 = vmatprep.subr.bf16.mxu0 0
    %2443 = vmatpush1.bf16.msra.mxu0 %v1856
    %2444 = vmatprep.subr.bf16.mxu0 0
    %2445 = vmatpush1.bf16.msra.mxu0 %v1855
    %2446 = vmatprep.subr.bf16.mxu0 0
    %2447 = vmatpush1.bf16.msra.mxu0 %v1854
    %2448 = vmatprep.subr.bf16.mxu0 0
    %2449 = vmatpush1.bf16.msra.mxu0 %v1853
    %2450 = vmatprep.subr.bf16.mxu0 0
    %2451 = vmatpush1.bf16.msra.mxu0 %v1852
    %2452 = vmatprep.subr.bf16.mxu0 0
    %2453 = vmatpush1.bf16.msra.mxu0 %v1851
    %2454 = vmatprep.subr.bf16.mxu0 0
    %2455 = vmatpush1.bf16.msra.mxu0 %v1850
    %2456 = vmatprep.subr.bf16.mxu0 0
    %2457 = vmatpush1.bf16.msra.mxu0 %v1849
    %2458 = vmatprep.subr.bf16.mxu0 0
    %2459 = vmatpush2.bf16.msra.mxu0 %v1864
    %2460 = vmatprep.subr.bf16.mxu0 0
    %2461 = vmatpush2.bf16.msra.mxu0 %v1863
    %2462 = vmatprep.subr.bf16.mxu0 0
    %2463 = vmatpush2.bf16.msra.mxu0 %v1862
    %2464 = vmatprep.subr.bf16.mxu0 0
    %2465 = vmatpush2.bf16.msra.mxu0 %v1861
    %2466 = vmatprep.subr.bf16.mxu0 0
    %2467 = vmatpush2.bf16.msra.mxu0 %v1860
    %2468 = vmatprep.subr.bf16.mxu0 0
    %2469 = vmatpush2.bf16.msra.mxu0 %v1859
    %2470 = vmatprep.subr.bf16.mxu0 0
    %2471 = vmatpush2.bf16.msra.mxu0 %v1858
    %2472 = vmatprep.subr.bf16.mxu0 0
    %2473 = vmatpush2.bf16.msra.mxu0 %v1857
    %2474 = vmatprep.mubr.bf16.mxu0 %v749
    %2475 = vmatmul.mubr.bf16.gmra.mxu0 %v748
    %v2476 = vpop.f32.mrf.mxu0
    %v2477 = vadd.f32 %v2437, %v2476
    %v2478 = vpop.f32.mrf.mxu0
    %v2479 = vpop.f32.mrf.mxu0
    %v2480 = vpop.f32.mrf.mxu0
    %2481 = vdwg.mxu0
    %2482 = vmatprep.subr.bf16.mxu0 0
    %2483 = vmatpush1.bf16.msra.mxu0 %v1872
    %2484 = vmatprep.subr.bf16.mxu0 0
    %2485 = vmatpush1.bf16.msra.mxu0 %v1871
    %2486 = vmatprep.subr.bf16.mxu0 0
    %2487 = vmatpush1.bf16.msra.mxu0 %v1870
    %2488 = vmatprep.subr.bf16.mxu0 0
    %2489 = vmatpush1.bf16.msra.mxu0 %v1869
    %2490 = vmatprep.subr.bf16.mxu0 0
    %2491 = vmatpush1.bf16.msra.mxu0 %v1868
    %2492 = vmatprep.subr.bf16.mxu0 0
    %2493 = vmatpush1.bf16.msra.mxu0 %v1867
    %2494 = vmatprep.subr.bf16.mxu0 0
    %2495 = vmatpush1.bf16.msra.mxu0 %v1866
    %2496 = vmatprep.subr.bf16.mxu0 0
    %2497 = vmatpush1.bf16.msra.mxu0 %v1865
    %2498 = vmatprep.subr.bf16.mxu0 0
    %2499 = vmatpush2.bf16.msra.mxu0 %v1880
    %2500 = vmatprep.subr.bf16.mxu0 0
    %2501 = vmatpush2.bf16.msra.mxu0 %v1879
    %2502 = vmatprep.subr.bf16.mxu0 0
    %2503 = vmatpush2.bf16.msra.mxu0 %v1878
    %2504 = vmatprep.subr.bf16.mxu0 0
    %2505 = vmatpush2.bf16.msra.mxu0 %v1877
    %2506 = vmatprep.subr.bf16.mxu0 0
    %2507 = vmatpush2.bf16.msra.mxu0 %v1876
    %2508 = vmatprep.subr.bf16.mxu0 0
    %2509 = vmatpush2.bf16.msra.mxu0 %v1875
    %2510 = vmatprep.subr.bf16.mxu0 0
    %2511 = vmatpush2.bf16.msra.mxu0 %v1874
    %2512 = vmatprep.subr.bf16.mxu0 0
    %2513 = vmatpush2.bf16.msra.mxu0 %v1873
    %2514 = vmatprep.mubr.bf16.mxu0 %v751
    %2515 = vmatmul.mubr.bf16.gmra.mxu0 %v750
    %v2516 = vpop.f32.mrf.mxu0
    %v2517 = vadd.f32 %v2477, %v2516
    %v2518 = vpop.f32.mrf.mxu0
    %v2519 = vpop.f32.mrf.mxu0
    %v2520 = vpop.f32.mrf.mxu0
    %2521 = vdwg.mxu0
    %2522 = vmatprep.subr.bf16.mxu0 0
    %2523 = vmatpush1.bf16.msra.mxu0 %v1888
    %2524 = vmatprep.subr.bf16.mxu0 0
    %2525 = vmatpush1.bf16.msra.mxu0 %v1887
    %2526 = vmatprep.subr.bf16.mxu0 0
    %2527 = vmatpush1.bf16.msra.mxu0 %v1886
    %2528 = vmatprep.subr.bf16.mxu0 0
    %2529 = vmatpush1.bf16.msra.mxu0 %v1885
    %2530 = vmatprep.subr.bf16.mxu0 0
    %2531 = vmatpush1.bf16.msra.mxu0 %v1884
    %2532 = vmatprep.subr.bf16.mxu0 0
    %2533 = vmatpush1.bf16.msra.mxu0 %v1883
    %2534 = vmatprep.subr.bf16.mxu0 0
    %2535 = vmatpush1.bf16.msra.mxu0 %v1882
    %2536 = vmatprep.subr.bf16.mxu0 0
    %2537 = vmatpush1.bf16.msra.mxu0 %v1881
    %2538 = vmatprep.subr.bf16.mxu0 0
    %2539 = vmatpush2.bf16.msra.mxu0 %v1896
    %2540 = vmatprep.subr.bf16.mxu0 0
    %2541 = vmatpush2.bf16.msra.mxu0 %v1895
    %2542 = vmatprep.subr.bf16.mxu0 0
    %2543 = vmatpush2.bf16.msra.mxu0 %v1894
    %2544 = vmatprep.subr.bf16.mxu0 0
    %2545 = vmatpush2.bf16.msra.mxu0 %v1893
    %2546 = vmatprep.subr.bf16.mxu0 0
    %2547 = vmatpush2.bf16.msra.mxu0 %v1892
    %2548 = vmatprep.subr.bf16.mxu0 0
    %2549 = vmatpush2.bf16.msra.mxu0 %v1891
    %2550 = vmatprep.subr.bf16.mxu0 0
    %2551 = vmatpush2.bf16.msra.mxu0 %v1890
    %2552 = vmatprep.subr.bf16.mxu0 0
    %2553 = vmatpush2.bf16.msra.mxu0 %v1889
    %2554 = vmatprep.mubr.bf16.mxu0 %v753
    %2555 = vmatmul.mubr.bf16.gmra.mxu0 %v752
    %v2556 = vpop.f32.mrf.mxu0
    %v2557 = vadd.f32 %v2517, %v2556
    %v2558 = vpop.f32.mrf.mxu0
    %v2559 = vpop.f32.mrf.mxu0
    %v2560 = vpop.f32.mrf.mxu0
    %2561 = vdwg.mxu0
    %2562 = vmatprep.subr.bf16.mxu0 0
    %2563 = vmatpush1.bf16.msra.mxu0 %v1904
    %2564 = vmatprep.subr.bf16.mxu0 0
    %2565 = vmatpush1.bf16.msra.mxu0 %v1903
    %2566 = vmatprep.subr.bf16.mxu0 0
    %2567 = vmatpush1.bf16.msra.mxu0 %v1902
    %2568 = vmatprep.subr.bf16.mxu0 0
    %2569 = vmatpush1.bf16.msra.mxu0 %v1901
    %2570 = vmatprep.subr.bf16.mxu0 0
    %2571 = vmatpush1.bf16.msra.mxu0 %v1900
    %2572 = vmatprep.subr.bf16.mxu0 0
    %2573 = vmatpush1.bf16.msra.mxu0 %v1899
    %2574 = vmatprep.subr.bf16.mxu0 0
    %2575 = vmatpush1.bf16.msra.mxu0 %v1898
    %2576 = vmatprep.subr.bf16.mxu0 0
    %2577 = vmatpush1.bf16.msra.mxu0 %v1897
    %2578 = vmatprep.subr.bf16.mxu0 0
    %2579 = vmatpush2.bf16.msra.mxu0 %v1912
    %2580 = vmatprep.subr.bf16.mxu0 0
    %2581 = vmatpush2.bf16.msra.mxu0 %v1911
    %2582 = vmatprep.subr.bf16.mxu0 0
    %2583 = vmatpush2.bf16.msra.mxu0 %v1910
    %2584 = vmatprep.subr.bf16.mxu0 0
    %2585 = vmatpush2.bf16.msra.mxu0 %v1909
    %2586 = vmatprep.subr.bf16.mxu0 0
    %2587 = vmatpush2.bf16.msra.mxu0 %v1908
    %2588 = vmatprep.subr.bf16.mxu0 0
    %2589 = vmatpush2.bf16.msra.mxu0 %v1907
    %2590 = vmatprep.subr.bf16.mxu0 0
    %2591 = vmatpush2.bf16.msra.mxu0 %v1906
    %2592 = vmatprep.subr.bf16.mxu0 0
    %2593 = vmatpush2.bf16.msra.mxu0 %v1905
    %2594 = vmatprep.mubr.bf16.mxu0 %v755
    %2595 = vmatmul.mubr.bf16.gmra.mxu0 %v754
    %v2596 = vpop.f32.mrf.mxu0
    %v2597 = vadd.f32 %v2557, %v2596
    %v2598 = vpop.f32.mrf.mxu0
    %v2599 = vpop.f32.mrf.mxu0
    %v2600 = vpop.f32.mrf.mxu0
    %2601 = vdwg.mxu0
    %2602 = vmatprep.subr.bf16.mxu0 0
    %2603 = vmatpush1.bf16.msra.mxu0 %v1920
    %2604 = vmatprep.subr.bf16.mxu0 0
    %2605 = vmatpush1.bf16.msra.mxu0 %v1919
    %2606 = vmatprep.subr.bf16.mxu0 0
    %2607 = vmatpush1.bf16.msra.mxu0 %v1918
    %2608 = vmatprep.subr.bf16.mxu0 0
    %2609 = vmatpush1.bf16.msra.mxu0 %v1917
    %2610 = vmatprep.subr.bf16.mxu0 0
    %2611 = vmatpush1.bf16.msra.mxu0 %v1916
    %2612 = vmatprep.subr.bf16.mxu0 0
    %2613 = vmatpush1.bf16.msra.mxu0 %v1915
    %2614 = vmatprep.subr.bf16.mxu0 0
    %2615 = vmatpush1.bf16.msra.mxu0 %v1914
    %2616 = vmatprep.subr.bf16.mxu0 0
    %2617 = vmatpush1.bf16.msra.mxu0 %v1913
    %2618 = vmatprep.subr.bf16.mxu0 0
    %2619 = vmatpush2.bf16.msra.mxu0 %v1928
    %2620 = vmatprep.subr.bf16.mxu0 0
    %2621 = vmatpush2.bf16.msra.mxu0 %v1927
    %2622 = vmatprep.subr.bf16.mxu0 0
    %2623 = vmatpush2.bf16.msra.mxu0 %v1926
    %2624 = vmatprep.subr.bf16.mxu0 0
    %2625 = vmatpush2.bf16.msra.mxu0 %v1925
    %2626 = vmatprep.subr.bf16.mxu0 0
    %2627 = vmatpush2.bf16.msra.mxu0 %v1924
    %2628 = vmatprep.subr.bf16.mxu0 0
    %2629 = vmatpush2.bf16.msra.mxu0 %v1923
    %2630 = vmatprep.subr.bf16.mxu0 0
    %2631 = vmatpush2.bf16.msra.mxu0 %v1922
    %2632 = vmatprep.subr.bf16.mxu0 0
    %2633 = vmatpush2.bf16.msra.mxu0 %v1921
    %2634 = vmatprep.mubr.bf16.mxu0 %v757
    %2635 = vmatmul.mubr.bf16.gmra.mxu0 %v756
    %v2636 = vpop.f32.mrf.mxu0
    %v2637 = vadd.f32 %v2597, %v2636
    %v2638 = vpop.f32.mrf.mxu0
    %v2639 = vpop.f32.mrf.mxu0
    %v2640 = vpop.f32.mrf.mxu0
    %2641 = vdwg.mxu0
    %2642 = vmatprep.subr.bf16.mxu0 0
    %2643 = vmatpush1.bf16.msra.mxu0 %v1936
    %2644 = vmatprep.subr.bf16.mxu0 0
    %2645 = vmatpush1.bf16.msra.mxu0 %v1935
    %2646 = vmatprep.subr.bf16.mxu0 0
    %2647 = vmatpush1.bf16.msra.mxu0 %v1934
    %2648 = vmatprep.subr.bf16.mxu0 0
    %2649 = vmatpush1.bf16.msra.mxu0 %v1933
    %2650 = vmatprep.subr.bf16.mxu0 0
    %2651 = vmatpush1.bf16.msra.mxu0 %v1932
    %2652 = vmatprep.subr.bf16.mxu0 0
    %2653 = vmatpush1.bf16.msra.mxu0 %v1931
    %2654 = vmatprep.subr.bf16.mxu0 0
    %2655 = vmatpush1.bf16.msra.mxu0 %v1930
    %2656 = vmatprep.subr.bf16.mxu0 0
    %2657 = vmatpush1.bf16.msra.mxu0 %v1929
    %2658 = vmatprep.subr.bf16.mxu0 0
    %2659 = vmatpush2.bf16.msra.mxu0 %v1944
    %2660 = vmatprep.subr.bf16.mxu0 0
    %2661 = vmatpush2.bf16.msra.mxu0 %v1943
    %2662 = vmatprep.subr.bf16.mxu0 0
    %2663 = vmatpush2.bf16.msra.mxu0 %v1942
    %2664 = vmatprep.subr.bf16.mxu0 0
    %2665 = vmatpush2.bf16.msra.mxu0 %v1941
    %2666 = vmatprep.subr.bf16.mxu0 0
    %2667 = vmatpush2.bf16.msra.mxu0 %v1940
    %2668 = vmatprep.subr.bf16.mxu0 0
    %2669 = vmatpush2.bf16.msra.mxu0 %v1939
    %2670 = vmatprep.subr.bf16.mxu0 0
    %2671 = vmatpush2.bf16.msra.mxu0 %v1938
    %2672 = vmatprep.subr.bf16.mxu0 0
    %2673 = vmatpush2.bf16.msra.mxu0 %v1937
    %2674 = vmatprep.mubr.bf16.mxu0 %v759
    %2675 = vmatmul.mubr.bf16.gmra.mxu0 %v758
    %v2676 = vpop.f32.mrf.mxu0
    %v2677 = vadd.f32 %v2637, %v2676
    %v2678 = vpop.f32.mrf.mxu0
    %v2679 = vpop.f32.mrf.mxu0
    %v2680 = vpop.f32.mrf.mxu0
    %2681 = vdwg.mxu0
    %2682 = vmatprep.subr.bf16.mxu0 0
    %2683 = vmatpush1.bf16.msra.mxu0 %v1952
    %2684 = vmatprep.subr.bf16.mxu0 0
    %2685 = vmatpush1.bf16.msra.mxu0 %v1951
    %2686 = vmatprep.subr.bf16.mxu0 0
    %2687 = vmatpush1.bf16.msra.mxu0 %v1950
    %2688 = vmatprep.subr.bf16.mxu0 0
    %2689 = vmatpush1.bf16.msra.mxu0 %v1949
    %2690 = vmatprep.subr.bf16.mxu0 0
    %2691 = vmatpush1.bf16.msra.mxu0 %v1948
    %2692 = vmatprep.subr.bf16.mxu0 0
    %2693 = vmatpush1.bf16.msra.mxu0 %v1947
    %2694 = vmatprep.subr.bf16.mxu0 0
    %2695 = vmatpush1.bf16.msra.mxu0 %v1946
    %2696 = vmatprep.subr.bf16.mxu0 0
    %2697 = vmatpush1.bf16.msra.mxu0 %v1945
    %2698 = vmatprep.subr.bf16.mxu0 0
    %2699 = vmatpush2.bf16.msra.mxu0 %v1960
    %2700 = vmatprep.subr.bf16.mxu0 0
    %2701 = vmatpush2.bf16.msra.mxu0 %v1959
    %2702 = vmatprep.subr.bf16.mxu0 0
    %2703 = vmatpush2.bf16.msra.mxu0 %v1958
    %2704 = vmatprep.subr.bf16.mxu0 0
    %2705 = vmatpush2.bf16.msra.mxu0 %v1957
    %2706 = vmatprep.subr.bf16.mxu0 0
    %2707 = vmatpush2.bf16.msra.mxu0 %v1956
    %2708 = vmatprep.subr.bf16.mxu0 0
    %2709 = vmatpush2.bf16.msra.mxu0 %v1955
    %2710 = vmatprep.subr.bf16.mxu0 0
    %2711 = vmatpush2.bf16.msra.mxu0 %v1954
    %2712 = vmatprep.subr.bf16.mxu0 0
    %2713 = vmatpush2.bf16.msra.mxu0 %v1953
    %2714 = vmatprep.mubr.bf16.mxu0 %v761
    %2715 = vmatmul.mubr.bf16.gmra.mxu0 %v760
    %v2716 = vpop.f32.mrf.mxu0
    %v2717 = vadd.f32 %v2677, %v2716
    %v2718 = vpop.f32.mrf.mxu0
    %v2719 = vpop.f32.mrf.mxu0
    %v2720 = vpop.f32.mrf.mxu0
    %2721 = vdwg.mxu0
    %2722 = vmatprep.subr.bf16.mxu0 0
    %2723 = vmatpush1.bf16.msra.mxu0 %v1968
    %2724 = vmatprep.subr.bf16.mxu0 0
    %2725 = vmatpush1.bf16.msra.mxu0 %v1967
    %2726 = vmatprep.subr.bf16.mxu0 0
    %2727 = vmatpush1.bf16.msra.mxu0 %v1966
    %2728 = vmatprep.subr.bf16.mxu0 0
    %2729 = vmatpush1.bf16.msra.mxu0 %v1965
    %2730 = vmatprep.subr.bf16.mxu0 0
    %2731 = vmatpush1.bf16.msra.mxu0 %v1964
    %2732 = vmatprep.subr.bf16.mxu0 0
    %2733 = vmatpush1.bf16.msra.mxu0 %v1963
    %2734 = vmatprep.subr.bf16.mxu0 0
    %2735 = vmatpush1.bf16.msra.mxu0 %v1962
    %2736 = vmatprep.subr.bf16.mxu0 0
    %2737 = vmatpush1.bf16.msra.mxu0 %v1961
    %2738 = vmatprep.subr.bf16.mxu0 0
    %2739 = vmatpush2.bf16.msra.mxu0 %v1976
    %2740 = vmatprep.subr.bf16.mxu0 0
    %2741 = vmatpush2.bf16.msra.mxu0 %v1975
    %2742 = vmatprep.subr.bf16.mxu0 0
    %2743 = vmatpush2.bf16.msra.mxu0 %v1974
    %2744 = vmatprep.subr.bf16.mxu0 0
    %2745 = vmatpush2.bf16.msra.mxu0 %v1973
    %2746 = vmatprep.subr.bf16.mxu0 0
    %2747 = vmatpush2.bf16.msra.mxu0 %v1972
    %2748 = vmatprep.subr.bf16.mxu0 0
    %2749 = vmatpush2.bf16.msra.mxu0 %v1971
    %2750 = vmatprep.subr.bf16.mxu0 0
    %2751 = vmatpush2.bf16.msra.mxu0 %v1970
    %2752 = vmatprep.subr.bf16.mxu0 0
    %2753 = vmatpush2.bf16.msra.mxu0 %v1969
    %2754 = vmatprep.mubr.bf16.mxu0 %v763
    %2755 = vmatmul.mubr.bf16.gmra.mxu0 %v762
    %v2756 = vpop.f32.mrf.mxu0
    %v2757 = vadd.f32 %v2717, %v2756
    %v2758 = vpop.f32.mrf.mxu0
    %v2759 = vpop.f32.mrf.mxu0
    %v2760 = vpop.f32.mrf.mxu0
    %2761 = vdwg.mxu0
    %2762 = vmatprep.subr.bf16.mxu0 0
    %2763 = vmatpush1.bf16.msra.mxu0 %v1984
    %2764 = vmatprep.subr.bf16.mxu0 0
    %2765 = vmatpush1.bf16.msra.mxu0 %v1983
    %2766 = vmatprep.subr.bf16.mxu0 0
    %2767 = vmatpush1.bf16.msra.mxu0 %v1982
    %2768 = vmatprep.subr.bf16.mxu0 0
    %2769 = vmatpush1.bf16.msra.mxu0 %v1981
    %2770 = vmatprep.subr.bf16.mxu0 0
    %2771 = vmatpush1.bf16.msra.mxu0 %v1980
    %2772 = vmatprep.subr.bf16.mxu0 0
    %2773 = vmatpush1.bf16.msra.mxu0 %v1979
    %2774 = vmatprep.subr.bf16.mxu0 0
    %2775 = vmatpush1.bf16.msra.mxu0 %v1978
    %2776 = vmatprep.subr.bf16.mxu0 0
    %2777 = vmatpush1.bf16.msra.mxu0 %v1977
    %2778 = vmatprep.subr.bf16.mxu0 0
    %2779 = vmatpush2.bf16.msra.mxu0 %v1992
    %2780 = vmatprep.subr.bf16.mxu0 0
    %2781 = vmatpush2.bf16.msra.mxu0 %v1991
    %2782 = vmatprep.subr.bf16.mxu0 0
    %2783 = vmatpush2.bf16.msra.mxu0 %v1990
    %2784 = vmatprep.subr.bf16.mxu0 0
    %2785 = vmatpush2.bf16.msra.mxu0 %v1989
    %2786 = vmatprep.subr.bf16.mxu0 0
    %2787 = vmatpush2.bf16.msra.mxu0 %v1988
    %2788 = vmatprep.subr.bf16.mxu0 0
    %2789 = vmatpush2.bf16.msra.mxu0 %v1987
    %2790 = vmatprep.subr.bf16.mxu0 0
    %2791 = vmatpush2.bf16.msra.mxu0 %v1986
    %2792 = vmatprep.subr.bf16.mxu0 0
    %2793 = vmatpush2.bf16.msra.mxu0 %v1985
    %2794 = vmatprep.mubr.bf16.mxu0 %v765
    %2795 = vmatmul.mubr.bf16.gmra.mxu0 %v764
    %v2796 = vpop.f32.mrf.mxu0
    %v2797 = vadd.f32 %v2757, %v2796
    %v2798 = vpop.f32.mrf.mxu0
    %v2799 = vpop.f32.mrf.mxu0
    %v2800 = vpop.f32.mrf.mxu0
    %2801 = vdwg.mxu0
    %2802 = vmatprep.subr.bf16.mxu0 0
    %2803 = vmatpush1.bf16.msra.mxu0 %v2000
    %2804 = vmatprep.subr.bf16.mxu0 0
    %2805 = vmatpush1.bf16.msra.mxu0 %v1999
    %2806 = vmatprep.subr.bf16.mxu0 0
    %2807 = vmatpush1.bf16.msra.mxu0 %v1998
    %2808 = vmatprep.subr.bf16.mxu0 0
    %2809 = vmatpush1.bf16.msra.mxu0 %v1997
    %2810 = vmatprep.subr.bf16.mxu0 0
    %2811 = vmatpush1.bf16.msra.mxu0 %v1996
    %2812 = vmatprep.subr.bf16.mxu0 0
    %2813 = vmatpush1.bf16.msra.mxu0 %v1995
    %2814 = vmatprep.subr.bf16.mxu0 0
    %2815 = vmatpush1.bf16.msra.mxu0 %v1994
    %2816 = vmatprep.subr.bf16.mxu0 0
    %2817 = vmatpush1.bf16.msra.mxu0 %v1993
    %2818 = vmatprep.subr.bf16.mxu0 0
    %2819 = vmatpush2.bf16.msra.mxu0 %v2008
    %2820 = vmatprep.subr.bf16.mxu0 0
    %2821 = vmatpush2.bf16.msra.mxu0 %v2007
    %2822 = vmatprep.subr.bf16.mxu0 0
    %2823 = vmatpush2.bf16.msra.mxu0 %v2006
    %2824 = vmatprep.subr.bf16.mxu0 0
    %2825 = vmatpush2.bf16.msra.mxu0 %v2005
    %2826 = vmatprep.subr.bf16.mxu0 0
    %2827 = vmatpush2.bf16.msra.mxu0 %v2004
    %2828 = vmatprep.subr.bf16.mxu0 0
    %2829 = vmatpush2.bf16.msra.mxu0 %v2003
    %2830 = vmatprep.subr.bf16.mxu0 0
    %2831 = vmatpush2.bf16.msra.mxu0 %v2002
    %2832 = vmatprep.subr.bf16.mxu0 0
    %2833 = vmatpush2.bf16.msra.mxu0 %v2001
    %2834 = vmatprep.mubr.bf16.mxu0 %v767
    %2835 = vmatmul.mubr.bf16.gmra.mxu0 %v766
    %v2836 = vpop.f32.mrf.mxu0
    %v2837 = vadd.f32 %v2797, %v2836
    %v2838 = vpop.f32.mrf.mxu0
    %v2839 = vpop.f32.mrf.mxu0
    %v2840 = vpop.f32.mrf.mxu0
    %2841 = vdwg.mxu0
    %2842 = vmatprep.subr.bf16.mxu0 0
    %2843 = vmatpush1.bf16.msra.mxu0 %v2016
    %2844 = vmatprep.subr.bf16.mxu0 0
    %2845 = vmatpush1.bf16.msra.mxu0 %v2015
    %2846 = vmatprep.subr.bf16.mxu0 0
    %2847 = vmatpush1.bf16.msra.mxu0 %v2014
    %2848 = vmatprep.subr.bf16.mxu0 0
    %2849 = vmatpush1.bf16.msra.mxu0 %v2013
    %2850 = vmatprep.subr.bf16.mxu0 0
    %2851 = vmatpush1.bf16.msra.mxu0 %v2012
    %2852 = vmatprep.subr.bf16.mxu0 0
    %2853 = vmatpush1.bf16.msra.mxu0 %v2011
    %2854 = vmatprep.subr.bf16.mxu0 0
    %2855 = vmatpush1.bf16.msra.mxu0 %v2010
    %2856 = vmatprep.subr.bf16.mxu0 0
    %2857 = vmatpush1.bf16.msra.mxu0 %v2009
    %2858 = vmatprep.subr.bf16.mxu0 0
    %2859 = vmatpush2.bf16.msra.mxu0 %v2024
    %2860 = vmatprep.subr.bf16.mxu0 0
    %2861 = vmatpush2.bf16.msra.mxu0 %v2023
    %2862 = vmatprep.subr.bf16.mxu0 0
    %2863 = vmatpush2.bf16.msra.mxu0 %v2022
    %2864 = vmatprep.subr.bf16.mxu0 0
    %2865 = vmatpush2.bf16.msra.mxu0 %v2021
    %2866 = vmatprep.subr.bf16.mxu0 0
    %2867 = vmatpush2.bf16.msra.mxu0 %v2020
    %2868 = vmatprep.subr.bf16.mxu0 0
    %2869 = vmatpush2.bf16.msra.mxu0 %v2019
    %2870 = vmatprep.subr.bf16.mxu0 0
    %2871 = vmatpush2.bf16.msra.mxu0 %v2018
    %2872 = vmatprep.subr.bf16.mxu0 0
    %2873 = vmatpush2.bf16.msra.mxu0 %v2017
    %2874 = vmatprep.mubr.bf16.mxu0 %v769
    %2875 = vmatmul.mubr.bf16.gmra.mxu0 %v768
    %v2876 = vpop.f32.mrf.mxu0
    %v2877 = vadd.f32 %v2837, %v2876
    %v2878 = vpop.f32.mrf.mxu0
    %v2879 = vpop.f32.mrf.mxu0
    %v2880 = vpop.f32.mrf.mxu0
    %2881 = vdwg.mxu0
    %2882 = vmatprep.subr.bf16.mxu0 0
    %2883 = vmatpush1.bf16.msra.mxu0 %v2032
    %2884 = vmatprep.subr.bf16.mxu0 0
    %2885 = vmatpush1.bf16.msra.mxu0 %v2031
    %2886 = vmatprep.subr.bf16.mxu0 0
    %2887 = vmatpush1.bf16.msra.mxu0 %v2030
    %2888 = vmatprep.subr.bf16.mxu0 0
    %2889 = vmatpush1.bf16.msra.mxu0 %v2029
    %2890 = vmatprep.subr.bf16.mxu0 0
    %2891 = vmatpush1.bf16.msra.mxu0 %v2028
    %2892 = vmatprep.subr.bf16.mxu0 0
    %2893 = vmatpush1.bf16.msra.mxu0 %v2027
    %2894 = vmatprep.subr.bf16.mxu0 0
    %2895 = vmatpush1.bf16.msra.mxu0 %v2026
    %2896 = vmatprep.subr.bf16.mxu0 0
    %2897 = vmatpush1.bf16.msra.mxu0 %v2025
    %2898 = vmatprep.subr.bf16.mxu0 0
    %2899 = vmatpush2.bf16.msra.mxu0 %v2040
    %2900 = vmatprep.subr.bf16.mxu0 0
    %2901 = vmatpush2.bf16.msra.mxu0 %v2039
    %2902 = vmatprep.subr.bf16.mxu0 0
    %2903 = vmatpush2.bf16.msra.mxu0 %v2038
    %2904 = vmatprep.subr.bf16.mxu0 0
    %2905 = vmatpush2.bf16.msra.mxu0 %v2037
    %2906 = vmatprep.subr.bf16.mxu0 0
    %2907 = vmatpush2.bf16.msra.mxu0 %v2036
    %2908 = vmatprep.subr.bf16.mxu0 0
    %2909 = vmatpush2.bf16.msra.mxu0 %v2035
    %2910 = vmatprep.subr.bf16.mxu0 0
    %2911 = vmatpush2.bf16.msra.mxu0 %v2034
    %2912 = vmatprep.subr.bf16.mxu0 0
    %2913 = vmatpush2.bf16.msra.mxu0 %v2033
    %2914 = vmatprep.mubr.bf16.mxu0 %v771
    %2915 = vmatmul.mubr.bf16.gmra.mxu0 %v770
    %v2916 = vpop.f32.mrf.mxu0
    %v2917 = vadd.f32 %v2877, %v2916
    %v2918 = vpop.f32.mrf.mxu0
    %v2919 = vpop.f32.mrf.mxu0
    %v2920 = vpop.f32.mrf.mxu0
    %2921 = vdwg.mxu0
    %2922 = vmatprep.subr.bf16.mxu0 0
    %2923 = vmatpush1.bf16.msra.mxu0 %v2048
    %2924 = vmatprep.subr.bf16.mxu0 0
    %2925 = vmatpush1.bf16.msra.mxu0 %v2047
    %2926 = vmatprep.subr.bf16.mxu0 0
    %2927 = vmatpush1.bf16.msra.mxu0 %v2046
    %2928 = vmatprep.subr.bf16.mxu0 0
    %2929 = vmatpush1.bf16.msra.mxu0 %v2045
    %2930 = vmatprep.subr.bf16.mxu0 0
    %2931 = vmatpush1.bf16.msra.mxu0 %v2044
    %2932 = vmatprep.subr.bf16.mxu0 0
    %2933 = vmatpush1.bf16.msra.mxu0 %v2043
    %2934 = vmatprep.subr.bf16.mxu0 0
    %2935 = vmatpush1.bf16.msra.mxu0 %v2042
    %2936 = vmatprep.subr.bf16.mxu0 0
    %2937 = vmatpush1.bf16.msra.mxu0 %v2041
    %2938 = vmatprep.subr.bf16.mxu0 0
    %2939 = vmatpush2.bf16.msra.mxu0 %v2056
    %2940 = vmatprep.subr.bf16.mxu0 0
    %2941 = vmatpush2.bf16.msra.mxu0 %v2055
    %2942 = vmatprep.subr.bf16.mxu0 0
    %2943 = vmatpush2.bf16.msra.mxu0 %v2054
    %2944 = vmatprep.subr.bf16.mxu0 0
    %2945 = vmatpush2.bf16.msra.mxu0 %v2053
    %2946 = vmatprep.subr.bf16.mxu0 0
    %2947 = vmatpush2.bf16.msra.mxu0 %v2052
    %2948 = vmatprep.subr.bf16.mxu0 0
    %2949 = vmatpush2.bf16.msra.mxu0 %v2051
    %2950 = vmatprep.subr.bf16.mxu0 0
    %2951 = vmatpush2.bf16.msra.mxu0 %v2050
    %2952 = vmatprep.subr.bf16.mxu0 0
    %2953 = vmatpush2.bf16.msra.mxu0 %v2049
    %2954 = vmatprep.mubr.bf16.mxu0 %v773
    %2955 = vmatmul.mubr.bf16.gmra.mxu0 %v772
    %v2956 = vpop.f32.mrf.mxu0
    %v2957 = vadd.f32 %v2917, %v2956
    %v2958 = vpop.f32.mrf.mxu0
    %v2959 = vpop.f32.mrf.mxu0
    %v2960 = vpop.f32.mrf.mxu0
    %2961 = vdwg.mxu0
    %2962 = vmatprep.subr.bf16.mxu0 0
    %2963 = vmatpush1.bf16.msra.mxu0 0
    %2964 = vmatprep.subr.bf16.mxu0 0
    %2965 = vmatpush1.bf16.msra.mxu0 0
    %2966 = vmatprep.subr.bf16.mxu0 0
    %2967 = vmatpush1.bf16.msra.mxu0 0
    %2968 = vmatprep.subr.bf16.mxu0 0
    %2969 = vmatpush1.bf16.msra.mxu0 0
    %2970 = vmatprep.subr.bf16.mxu0 0
    %2971 = vmatpush1.bf16.msra.mxu0 0
    %2972 = vmatprep.subr.bf16.mxu0 0
    %2973 = vmatpush1.bf16.msra.mxu0 0
    %2974 = vmatprep.subr.bf16.mxu0 0
    %2975 = vmatpush1.bf16.msra.mxu0 0
    %2976 = vmatprep.subr.bf16.mxu0 0
    %2977 = vmatpush1.bf16.msra.mxu0 %v2320
    %2978 = vmatprep.subr.bf16.mxu0 0
    %2979 = vmatpush2.bf16.msra.mxu0 0
    %2980 = vmatprep.subr.bf16.mxu0 0
    %2981 = vmatpush2.bf16.msra.mxu0 0
    %2982 = vmatprep.subr.bf16.mxu0 0
    %2983 = vmatpush2.bf16.msra.mxu0 0
    %2984 = vmatprep.subr.bf16.mxu0 0
    %2985 = vmatpush2.bf16.msra.mxu0 0
    %2986 = vmatprep.subr.bf16.mxu0 0
    %2987 = vmatpush2.bf16.msra.mxu0 0
    %2988 = vmatprep.subr.bf16.mxu0 0
    %2989 = vmatpush2.bf16.msra.mxu0 0
    %2990 = vmatprep.subr.bf16.mxu0 0
    %2991 = vmatpush2.bf16.msra.mxu0 0
    %2992 = vmatprep.subr.bf16.mxu0 0
    %2993 = vmatpush2.bf16.msra.mxu0 0
    %2994 = vmatprep.mubr.bf16.mxu0 0
    %2995 = vmatmul.mubr.bf16.gmra.mxu0 %v2316
    %v2996 = vpop.f32.mrf.mxu0
    %v2997 = vadd.f32 %v2957, %v2996
    %v2998 = vpop.f32.mrf.mxu0
    %v2999 = vpop.f32.mrf.mxu0
    %v3000 = vpop.f32.mrf.mxu0
    %3001 = vdwg.mxu0
    %v3002 = vadd.f32 %v556, %v2997
    %vm3003 = vcmask 517120
    %3004 = vst.msk [vmem:[#allocation2] sm:$0x3] %vm3003, %v3002
    // Predicated region
    $region34: #{golf_ball_classifier.1} parent=1 // pred_check
      %p3005 = pneg %p28
    $region35: #{golf_ball_classifier.1} parent=1 // pred_check_branch
      %3007 = sbr.rel (%p3005) target = $region37
    $region36: #{golf_ball_classifier.1} parent=1 // pred_region
      %v3008 = vld [vmem:[#allocation2] sm:$0x3]
      %v3009 = vld [vmem:[%s2] sm:$0x1]
      %v3011 = vlaneseq
      %v3012 = vshrl.u32 %v3011, 7
      %v3013 = vsub.s32 0, %v3012
      %v3014 = vrot.slane %v3009, %v3013
      %v3016 = vadd.f32 %v3008, %v3014
      %v3017 = vmax.f32 %v3016, 0.0
      %v3018 = vld [vmem:[%s3] sm:$0xff]
      %v3019 = vld [vmem:[%s3 + $0x8] sm:$0xff]
      %v3020 = vld [vmem:[%s3 + $0x10] sm:$0xff]
      %v3021 = vld [vmem:[%s3 + $0x18] sm:$0xff]
      %v3022 = vld [vmem:[%s3 + $0x20] sm:$0xff]
      %v3023 = vld [vmem:[%s3 + $0x28] sm:$0xff]
      %v3024 = vld [vmem:[%s3 + $0x30] sm:$0xff]
      %v3025 = vld [vmem:[%s3 + $0x38] sm:$0xff]
      %v3026 = vld [vmem:[%s4] sm:$0x1]
      %v3028 = vlaneseq
      %v3029 = vshrl.u32 %v3028, 7
      %v3030 = vsub.s32 0, %v3029
      %v3031 = vrot.slane %v3026, %v3030
      %vm3033 = vcmask 523264
      %v3035 = vsel %vm3033, %v3017, 0
      %3037 = vmatprep.subr.mxu0 0.0
      %3038 = vmatpush1.msra.mxu0 0.0
      %3039 = vmatprep.subr.mxu0 0.0
      %3040 = vmatpush1.msra.mxu0 0.0
      %3041 = vmatprep.subr.mxu0 0.0
      %3042 = vmatpush1.msra.mxu0 0.0
      %3043 = vmatprep.subr.mxu0 0.0
      %3044 = vmatpush1.msra.mxu0 0.0
      %3045 = vmatprep.subr.mxu0 0.0
      %3046 = vmatpush1.msra.mxu0 0.0
      %3047 = vmatprep.subr.mxu0 0.0
      %3048 = vmatpush1.msra.mxu0 0.0
      %3049 = vmatprep.subr.mxu0 0.0
      %3050 = vmatpush1.msra.mxu0 0.0
      %3051 = vmatprep.subr.mxu0 0.0
      %3052 = vmatpush1.msra.mxu0 0.0
      %3053 = vmatprep.subr.mxu0 0.0
      %3054 = vmatpush1.msra.mxu0 %v3025
      %3055 = vmatprep.subr.mxu0 0.0
      %3056 = vmatpush1.msra.mxu0 %v3024
      %3057 = vmatprep.subr.mxu0 0.0
      %3058 = vmatpush1.msra.mxu0 %v3023
      %3059 = vmatprep.subr.mxu0 0.0
      %3060 = vmatpush1.msra.mxu0 %v3022
      %3061 = vmatprep.subr.mxu0 0.0
      %3062 = vmatpush1.msra.mxu0 %v3021
      %3063 = vmatprep.subr.mxu0 0.0
      %3064 = vmatpush1.msra.mxu0 %v3020
      %3065 = vmatprep.subr.mxu0 0.0
      %3066 = vmatpush1.msra.mxu0 %v3019
      %3067 = vmatprep.subr.mxu0 0.0
      %3068 = vmatpush1.msra.mxu0 %v3018
      %3069 = vmatprep.subr.mxu0 0.0
      %3070 = vmatpush2.msra.mxu0 0.0
      %3071 = vmatprep.subr.mxu0 0.0
      %3072 = vmatpush2.msra.mxu0 0.0
      %3073 = vmatprep.subr.mxu0 0.0
      %3074 = vmatpush2.msra.mxu0 0.0
      %3075 = vmatprep.subr.mxu0 0.0
      %3076 = vmatpush2.msra.mxu0 0.0
      %3077 = vmatprep.subr.mxu0 0.0
      %3078 = vmatpush2.msra.mxu0 0.0
      %3079 = vmatprep.subr.mxu0 0.0
      %3080 = vmatpush2.msra.mxu0 0.0
      %3081 = vmatprep.subr.mxu0 0.0
      %3082 = vmatpush2.msra.mxu0 0.0
      %3083 = vmatprep.subr.mxu0 0.0
      %3084 = vmatpush2.msra.mxu0 0.0
      %3085 = vmatprep.subr.mxu0 0.0
      %3086 = vmatpush2.msra.mxu0 0.0
      %3087 = vmatprep.subr.mxu0 0.0
      %3088 = vmatpush2.msra.mxu0 0.0
      %3089 = vmatprep.subr.mxu0 0.0
      %3090 = vmatpush2.msra.mxu0 0.0
      %3091 = vmatprep.subr.mxu0 0.0
      %3092 = vmatpush2.msra.mxu0 0.0
      %3093 = vmatprep.subr.mxu0 0.0
      %3094 = vmatpush2.msra.mxu0 0.0
      %3095 = vmatprep.subr.mxu0 0.0
      %3096 = vmatpush2.msra.mxu0 0.0
      %3097 = vmatprep.subr.mxu0 0.0
      %3098 = vmatpush2.msra.mxu0 0.0
      %3099 = vmatprep.subr.mxu0 0.0
      %3100 = vmatpush2.msra.mxu0 0.0
      %3101 = vmatprep.mubr.f32.mxu0 0.0
      %3102 = vmatmul.mubr.f32.gmra.mxu0 %v3035
      %v3103 = vpop.f32.mrf.mxu0
      %v3104 = vadd.f32 %v3031, %v3103
      %v3105 = vpop.f32.mrf.mxu0
      %3106 = vdwg.mxu0
      %v3107 = vmax.f32 %v3104, 0.0
      %v3108 = vld [vmem:[%s5] sm:$0xff]
      %v3109 = vld [vmem:[%s5 + $0x8] sm:$0xff]
      %v3110 = vld [vmem:[%s5 + $0x10] sm:$0xff]
      %v3111 = vld [vmem:[%s5 + $0x18] sm:$0xff]
      %v3112 = vld [vmem:[%s6] sm:$0x1]
      %v3114 = vlaneseq
      %v3115 = vshrl.u32 %v3114, 7
      %v3116 = vsub.s32 0, %v3115
      %v3117 = vrot.slane %v3112, %v3116
      %vm3119 = vcmask 261120
      %v3121 = vsel %vm3119, %v3107, 0
      %3123 = vmatprep.subr.mxu0 0.0
      %3124 = vmatpush1.msra.mxu0 0.0
      %3125 = vmatprep.subr.mxu0 0.0
      %3126 = vmatpush1.msra.mxu0 0.0
      %3127 = vmatprep.subr.mxu0 0.0
      %3128 = vmatpush1.msra.mxu0 0.0
      %3129 = vmatprep.subr.mxu0 0.0
      %3130 = vmatpush1.msra.mxu0 0.0
      %3131 = vmatprep.subr.mxu0 0.0
      %3132 = vmatpush1.msra.mxu0 0.0
      %3133 = vmatprep.subr.mxu0 0.0
      %3134 = vmatpush1.msra.mxu0 0.0
      %3135 = vmatprep.subr.mxu0 0.0
      %3136 = vmatpush1.msra.mxu0 0.0
      %3137 = vmatprep.subr.mxu0 0.0
      %3138 = vmatpush1.msra.mxu0 0.0
      %3139 = vmatprep.subr.mxu0 0.0
      %3140 = vmatpush1.msra.mxu0 0.0
      %3141 = vmatprep.subr.mxu0 0.0
      %3142 = vmatpush1.msra.mxu0 0.0
      %3143 = vmatprep.subr.mxu0 0.0
      %3144 = vmatpush1.msra.mxu0 0.0
      %3145 = vmatprep.subr.mxu0 0.0
      %3146 = vmatpush1.msra.mxu0 0.0
      %3147 = vmatprep.subr.mxu0 0.0
      %3148 = vmatpush1.msra.mxu0 %v3111
      %3149 = vmatprep.subr.mxu0 0.0
      %3150 = vmatpush1.msra.mxu0 %v3110
      %3151 = vmatprep.subr.mxu0 0.0
      %3152 = vmatpush1.msra.mxu0 %v3109
      %3153 = vmatprep.subr.mxu0 0.0
      %3154 = vmatpush1.msra.mxu0 %v3108
      %3155 = vmatprep.subr.mxu0 0.0
      %3156 = vmatpush2.msra.mxu0 0.0
      %3157 = vmatprep.subr.mxu0 0.0
      %3158 = vmatpush2.msra.mxu0 0.0
      %3159 = vmatprep.subr.mxu0 0.0
      %3160 = vmatpush2.msra.mxu0 0.0
      %3161 = vmatprep.subr.mxu0 0.0
      %3162 = vmatpush2.msra.mxu0 0.0
      %3163 = vmatprep.subr.mxu0 0.0
      %3164 = vmatpush2.msra.mxu0 0.0
      %3165 = vmatprep.subr.mxu0 0.0
      %3166 = vmatpush2.msra.mxu0 0.0
      %3167 = vmatprep.subr.mxu0 0.0
      %3168 = vmatpush2.msra.mxu0 0.0
      %3169 = vmatprep.subr.mxu0 0.0
      %3170 = vmatpush2.msra.mxu0 0.0
      %3171 = vmatprep.subr.mxu0 0.0
      %3172 = vmatpush2.msra.mxu0 0.0
      %3173 = vmatprep.subr.mxu0 0.0
      %3174 = vmatpush2.msra.mxu0 0.0
      %3175 = vmatprep.subr.mxu0 0.0
      %3176 = vmatpush2.msra.mxu0 0.0
      %3177 = vmatprep.subr.mxu0 0.0
      %3178 = vmatpush2.msra.mxu0 0.0
      %3179 = vmatprep.subr.mxu0 0.0
      %3180 = vmatpush2.msra.mxu0 0.0
      %3181 = vmatprep.subr.mxu0 0.0
      %3182 = vmatpush2.msra.mxu0 0.0
      %3183 = vmatprep.subr.mxu0 0.0
      %3184 = vmatpush2.msra.mxu0 0.0
      %3185 = vmatprep.subr.mxu0 0.0
      %3186 = vmatpush2.msra.mxu0 0.0
      %3187 = vmatprep.mubr.f32.mxu0 0.0
      %3188 = vmatmul.mubr.f32.gmra.mxu0 %v3121
      %v3189 = vpop.f32.mrf.mxu0
      %v3190 = vadd.f32 %v3117, %v3189
      %v3191 = vpop.f32.mrf.mxu0
      %3192 = vdwg.mxu0
      %vm3193 = vcmask 9216
      %3194 = vst.msk [vmem:[#allocation3] sm:$0x3] %vm3193, %v3190
    $region37: #{golf_ball_classifier.1} parent=1 // pred_fallthru
      _
    // Predicated region
    $region38: #{golf_ball_classifier.1} parent=1 // pred_check
      _
    $region39: #{golf_ball_classifier.1} parent=1 // pred_check_branch
      %3196 = sbr.rel (0) target = $region41
    $region40: #{golf_ball_classifier.1} parent=1 // pred_region
      %s3198 = ssub.s32 32, 32
      %3199 = vsyncadd [#allocation4], %s3198
      %s3201 = sshll.u32 [#allocation3], 4
      %s3202 = int_to_ptr.vmem [resolvable:$true] %s3201
      %3204 = dma.vmem_to_hbm [thread:$0]  %s3202, 32, %s7, [#allocation4]
    $region41: #{golf_ball_classifier.1} parent=1 // pred_fallthru
      _
    // Predicated region
    $region42: #{golf_ball_classifier.1} parent=1 // pred_check
      _
    $region43: #{golf_ball_classifier.1} parent=1 // pred_check_branch
      %3206 = sbr.rel (0) target = $region45
    $region44: #{golf_ball_classifier.1} parent=1 // pred_region
      %3207 = dma.done [#allocation4], 32
    $region45: #{golf_ball_classifier.1} parent=1 // pred_fallthru
      _
    %3208 = vsyncpa [#allocation4], 1

</llo_original>
